<compile_context>
chip_gen: v7x
topology: tpu7x:2x2x1
jax: 0.10.0
libtpu: 0.0.40
codegen_flags: <defaults>
</compile_context>

<pallas_src>
import math
import functools

import jax
import jax.numpy as jnp
from jax.experimental import pallas as pl
from jax.experimental.pallas import tpu as pltpu


# --------------------------------------------------------------------------
# small helpers (run in f32 inside the kernels)
# --------------------------------------------------------------------------
def _gelu_tanh(x):
    c = math.sqrt(2.0 / math.pi)
    return 0.5 * x * (1.0 + jnp.tanh(c * (x + 0.044715 * x * x * x)))


def _layernorm(x, gamma, beta, eps=1e-5):
    mu = jnp.mean(x, axis=-1, keepdims=True)
    xc = x - mu
    var = jnp.mean(xc * xc, axis=-1, keepdims=True)
    return xc * jax.lax.rsqrt(var + eps) * gamma + beta


def _pick_tile(n, target):
    for c in (target, 512, 256, 128, 64, 32, 16, 8):
        if c is not None and c <= n and n % c == 0:
            return c
    return n


def _device_defaults():
    """Generation-aware (vmem_limit_bytes, tile_target).

    v5e/v6e: 128 MiB VMEM -> ~100 MiB limit, 512-wide tiles (halves K/V HBM
    rereads on the slower-HBM parts).  v7x: 64 MiB per TensorCore -> leave
    headroom for compiler scratch, keep 256-wide tiles.
    """
    vmem_cap = 128 * 1024 * 1024
    try:
        info = pltpu.get_tpu_info()
        vmem_cap = int(getattr(info, "vmem_capacity_bytes", vmem_cap))
    except Exception:
        pass
    if vmem_cap >= 100 * 1024 * 1024:
        return 100 * 1024 * 1024, 512
    return max(vmem_cap - 16 * 1024 * 1024, 32 * 1024 * 1024), 256


# --------------------------------------------------------------------------
# Kernel A: LN1 + fused QKV projection, single head-major output
# --------------------------------------------------------------------------
def qkv_kernel(x_ref, g_ref, b_ref, w_ref, bias_ref, qkv_ref,
               *, n_head, compute_dtype):
    x = x_ref[0]                                    # (TQ, C) f32
    tq, C = x.shape
    hd = C // n_head

    xn = _layernorm(x, g_ref[...], b_ref[...])      # f32 stats
    qkv = jnp.dot(xn.astype(compute_dtype), w_ref[...],
                  preferred_element_type=jnp.float32) + bias_ref[...]   # (TQ, 3C)

    # One fused relayout (TQ, 3C) -> (3H, TQ, hd) instead of three per-part
    # reshape+transposes.  1/sqrt(hd) is already folded into W_q / b_q.
    # TODO(synk): for hd < 128 the hd-minor store is lane-masked (vst.msk);
    #   a lane-dense head-pair packing or pltpu.einshape relayout would
    #   remove that cost once verified on this Pallas build.
    hm = jnp.transpose(qkv.reshape(tq, 3 * n_head, hd), (1, 0, 2))
    qkv_ref[0] = hm.astype(compute_dtype)


# --------------------------------------------------------------------------
# Kernel B: flash attention over a triangular (qi, ki) grid
# --------------------------------------------------------------------------
def flash_attn_kernel(qi_ref, ki_ref, q_ref, k_ref, v_ref, o_ref,
                      m_sc, l_sc, acc_sc, *, tq, tk, n_head, hd, approx_recip):
    p = pl.program_id(1)
    qi = qi_ref[p]
    ki = ki_ref[p]
    last_kv = (qi * tq + tq - 1) // tk              # last causally-relevant kv tile
    needs_mask = (ki + 1) * tk - 1 > qi * tq        # tile straddles the diagonal

    @pl.when(ki == 0)
    def _():
        m_sc[...] = jnp.full_like(m_sc, -jnp.inf)
        l_sc[...] = jnp.zeros_like(l_sc)
        acc_sc[...] = jnp.zeros_like(acc_sc)

    def update(apply_mask):
        q = q_ref[0]                                # (H, TQ, hd)
        k = k_ref[0]                                # (H, TK, hd)
        v = v_ref[0]
        s = jnp.einsum("hqd,hkd->hqk", q, k,
                       preferred_element_type=jnp.float32)              # (H, TQ, TK)
        if apply_mask:
            row = qi * tq + jax.lax.broadcasted_iota(jnp.int32, (tq, tk), 0)
            col = ki * tk + jax.lax.broadcasted_iota(jnp.int32, (tq, tk), 1)
            s = jnp.where((row >= col)[None, :, :], s, -1e30)

        m_prev = m_sc[...]                          # (H, TQ, 1)
        m_new = jnp.maximum(m_prev, jnp.max(s, axis=-1, keepdims=True))
        alpha = jnp.exp(m_prev - m_new)
        pm = jnp.exp(s - m_new)
        l_sc[...] = alpha * l_sc[...] + jnp.sum(pm, axis=-1, keepdims=True)
        acc_sc[...] = alpha * acc_sc[...] + jnp.einsum(
            "hqk,hkd->hqd", pm.astype(v.dtype), v,
            preferred_element_type=jnp.float32)
        m_sc[...] = m_new

    # Mask work only on diagonal-straddling tiles; plain path elsewhere.
    @pl.when(needs_mask)
    def _():
        update(True)

    @pl.when(jnp.logical_not(needs_mask))
    def _():
        update(False)

    @pl.when(ki == last_kv)
    def _():
        inv_l = pl.reciprocal(l_sc[...], approx=approx_recip)
        out = acc_sc[...] * inv_l                                        # (H, TQ, hd)
        # Head merge kept lane-dense: (TQ, C) output, C a multiple of 128.
        # (Head-major output + folding the merge into w_ap only pays off
        #  when hd >= 128; GPT-2 has hd = 64.)
        out = jnp.transpose(out, (1, 0, 2)).reshape(tq, n_head * hd)
        o_ref[0] = out.astype(o_ref.dtype)


# --------------------------------------------------------------------------
# Kernel C: attention projection + residual, LN2, MLP + residual
# --------------------------------------------------------------------------
def proj_mlp_kernel(x_ref, y_ref, w_ap_ref, b_ap_ref, g2_ref, b2_ref,
                    w_fc_ref, b_fc_ref, w_mp_ref, b_mp_ref, o_ref,
                    *, compute_dtype):
    x = x_ref[0]                                    # (TQ, C) f32 residual
    y = y_ref[0]                                    # (TQ, C) compute dtype

    att = jnp.dot(y, w_ap_ref[...],
                  preferred_element_type=jnp.float32) + b_ap_ref[...]
    x1 = x + att

    xn2 = _layernorm(x1, g2_ref[...], b2_ref[...])  # f32
    h = jnp.dot(xn2.astype(compute_dtype), w_fc_ref[...],
                preferred_element_type=jnp.float32) + b_fc_ref[...]
    h = _gelu_tanh(h)                               # f32 elementwise
    m = jnp.dot(h.astype(compute_dtype), w_mp_ref[...],
                preferred_element_type=jnp.float32) + b_mp_ref[...]

    o_ref[0] = (x1 + m).astype(o_ref.dtype)
    # TODO(synk): for C >= ~1280 on v7x even single-buffered resident MLP
    #   weights exceed the 64 MiB/TC VMEM; split into (proj+LN2) and a
    #   hidden-tiled MLP kernel with a reduction grid axis streaming
    #   w_fc/w_mp tiles through VMEM.


# --------------------------------------------------------------------------
# Wrapper
# --------------------------------------------------------------------------
def _gpt2_block_impl(x, params, n_head, *, compute_dtype, q_tile, kv_tile,
                     vmem_limit_bytes, weight_pipeline_mode):
    B, T, C = x.shape
    assert C % n_head == 0
    hd = C // n_head

    vmem_default, tile_default = _device_defaults()
    if vmem_limit_bytes is None:
        vmem_limit_bytes = vmem_default
    tq = _pick_tile(T, q_tile if q_tile is not None else tile_default)
    tk = _pick_tile(T, kv_tile if kv_tile is not None else tile_default)
    n_q = T // tq
    cd = compute_dtype
    f32 = lambda a: a.astype(jnp.float32)

    # Fold the 1/sqrt(hd) attention scale into the Q columns of w_qkv / b_qkv.
    scale = 1.0 / math.sqrt(hd)
    col_scale = jnp.concatenate([jnp.full((C,), scale, jnp.float32),
                                 jnp.ones((2 * C,), jnp.float32)])
    w_qkv = (f32(params["w_qkv"]) * col_scale[None, :]).astype(cd)
    b_qkv = f32(params["b_qkv"]) * col_scale[None, :]
    w_ap = params["w_ap"].astype(cd)
    w_fc = params["w_fc"].astype(cd)
    w_mp = params["w_mp"].astype(cd)

    cparams_2d = pltpu.CompilerParams(
        dimension_semantics=("parallel", "parallel"),
        vmem_limit_bytes=vmem_limit_bytes)
    cparams_attn = pltpu.CompilerParams(
        dimension_semantics=("parallel", "arbitrary"),
        vmem_limit_bytes=vmem_limit_bytes)

    def const_spec(shape):
        nd = len(shape)
        return pl.BlockSpec(shape, lambda *_: (0,) * nd)

    def weight_spec(shape):
        # Constant-index weight blocks: single-buffer when supported.
        nd = len(shape)
        if weight_pipeline_mode is None:
            return pl.BlockSpec(shape, lambda *_: (0,) * nd)
        return pl.BlockSpec(shape, lambda *_: (0,) * nd,
                            pipeline_mode=weight_pipeline_mode)

    # ---- Kernel A: LN1 + QKV projection (head-major combined output) -------
    qkv_hm = pl.pallas_call(
        functools.partial(qkv_kernel, n_head=n_head, compute_dtype=cd),
        grid_spec=pltpu.PrefetchScalarGridSpec(
            num_scalar_prefetch=0,
            grid=(B, n_q),
            in_specs=[
                pl.BlockSpec((1, tq, C), lambda b, t: (b, t, 0)),
                const_spec((1, C)), const_spec((1, C)),
                weight_spec((C, 3 * C)), const_spec((1, 3 * C)),
            ],
            out_specs=pl.BlockSpec((1, 3 * n_head, tq, hd),
                                   lambda b, t: (b, 0, t, 0)),
        ),
        out_shape=jax.ShapeDtypeStruct((B, 3 * n_head, T, hd), cd),
        compiler_params=cparams_2d,
    )(x, f32(params["ln1_g"]), f32(params["ln1_b"]), w_qkv, b_qkv)

    # ---- Kernel B: flash attention over a triangular (qi, ki) grid ---------
    qi_list, ki_list = [], []
    for qi in range(n_q):
        for ki in range((qi * tq + tq - 1) // tk + 1):
            qi_list.append(qi)
            ki_list.append(ki)
    n_pairs = len(qi_list)
    qi_map = jnp.asarray(qi_list, jnp.int32)
    ki_map = jnp.asarray(ki_list, jnp.int32)

    y = pl.pallas_call(
        functools.partial(flash_attn_kernel, tq=tq, tk=tk, n_head=n_head,
                          hd=hd,
                          approx_recip=bool(jnp.dtype(cd) != jnp.dtype(jnp.float32))),
        grid_spec=pltpu.PrefetchScalarGridSpec(
            num_scalar_prefetch=2,
            grid=(B, n_pairs),
            in_specs=[
                pl.BlockSpec((1, n_head, tq, hd),
                             lambda b, p, qm, km: (b, 0, qm[p], 0)),   # Q heads
                pl.BlockSpec((1, n_head, tk, hd),
                             lambda b, p, qm, km: (b, 1, km[p], 0)),   # K heads
                pl.BlockSpec((1, n_head, tk, hd),
                             lambda b, p, qm, km: (b, 2, km[p], 0)),   # V heads
            ],
            out_specs=pl.BlockSpec((1, tq, C),
                                   lambda b, p, qm, km: (b, qm[p], 0)),
            scratch_shapes=[
                pltpu.VMEM((n_head, tq, 1), jnp.float32),   # running max
                pltpu.VMEM((n_head, tq, 1), jnp.float32),   # running denom
                pltpu.VMEM((n_head, tq, hd), jnp.float32),  # running numerator
            ],
        ),
        out_shape=jax.ShapeDtypeStruct((B, T, C), cd),
        compiler_params=cparams_attn,
    )(qi_map, ki_map, qkv_hm, qkv_hm, qkv_hm)

    # ---- Kernel C: proj + residual + LN2 + MLP + residual ------------------
    out = pl.pallas_call(
        functools.partial(proj_mlp_kernel, compute_dtype=cd),
        grid_spec=pltpu.PrefetchScalarGridSpec(
            num_scalar_prefetch=0,
            grid=(B, n_q),
            in_specs=[
                pl.BlockSpec((1, tq, C), lambda b, t: (b, t, 0)),   # x (residual)
                pl.BlockSpec((1, tq, C), lambda b, t: (b, t, 0)),   # attn out (pre-proj)
                weight_spec((C, C)), const_spec((1, C)),
                const_spec((1, C)), const_spec((1, C)),
                weight_spec((C, 4 * C)), const_spec((1, 4 * C)),
                weight_spec((4 * C, C)), const_spec((1, C)),
            ],
            out_specs=pl.BlockSpec((1, tq, C), lambda b, t: (b, t, 0)),
        ),
        out_shape=jax.ShapeDtypeStruct((B, T, C), x.dtype),
        compiler_params=cparams_2d,
    )(x, y, w_ap, f32(params["b_ap"]), f32(params["ln2_g"]), f32(params["ln2_b"]),
      w_fc, f32(params["b_fc"]), w_mp, f32(params["b_mp"]))

    return out


def gpt2_block(x, params, n_head, *, compute_dtype=jnp.bfloat16,
               q_tile=None, kv_tile=None, vmem_limit_bytes=None):
    kwargs = dict(compute_dtype=compute_dtype, q_tile=q_tile, kv_tile=kv_tile,
                  vmem_limit_bytes=vmem_limit_bytes)
    try:
        # Single-buffer the constant-index (resident) weight blocks.
        return _gpt2_block_impl(x, params, n_head,
                                weight_pipeline_mode=pl.Buffered(1), **kwargs)
    except Exception:
        # Fallback: some Pallas builds reject pipeline_mode on the top-level
        # grid pipeline -> default (double-buffered) weight specs.
        return _gpt2_block_impl(x, params, n_head,
                                weight_pipeline_mode=None, **kwargs)


# --------------------------------------------------------------------------
# Pure-JAX reference (matches the PyTorch Block forward)
# --------------------------------------------------------------------------
def reference_block(x, p, n_head):
    def ln(x, g, b):
        mu = jnp.mean(x, axis=-1, keepdims=True)
        var = jnp.mean((x - mu) ** 2, axis=-1, keepdims=True)
        return (x - mu) / jnp.sqrt(var + 1e-5) * g + b

    B, T, C = x.shape
    hd = C // n_head
    xn = ln(x, p["ln1_g"], p["ln1_b"])
    qkv = xn @ p["w_qkv"] + p["b_qkv"]
    q, k, v = jnp.split(qkv, 3, axis=-1)
    q = q.reshape(B, T, n_head, hd).transpose(0, 2, 1, 3)
    k = k.reshape(B, T, n_head, hd).transpose(0, 2, 1, 3)
    v = v.reshape(B, T, n_head, hd).transpose(0, 2, 1, 3)
    s = jnp.einsum("bhqd,bhkd->bhqk", q, k) / math.sqrt(hd)
    mask = jnp.tril(jnp.ones((T, T), bool))
    s = jnp.where(mask, s, -jnp.inf)
    a = jax.nn.softmax(s, axis=-1)
    y = jnp.einsum("bhqk,bhkd->bhqd", a, v).transpose(0, 2, 1, 3).reshape(B, T, C)
    y = y @ p["w_ap"] + p["b_ap"]
    x1 = x + y
    xn2 = ln(x1, p["ln2_g"], p["ln2_b"])
    h = xn2 @ p["w_fc"] + p["b_fc"]
    c = math.sqrt(2.0 / math.pi)
    h = 0.5 * h * (1.0 + jnp.tanh(c * (h + 0.044715 * h ** 3)))
    m = h @ p["w_mp"] + p["b_mp"]
    return x1 + m


# --------------------------------------------------------------------------
if __name__ == "__main__":
    B, T, C, n_head = 2, 8, 32, 4
    key = jax.random.PRNGKey(0)
    ks = jax.random.split(key, 8)

    params = {
        "ln1_g": jnp.ones((1, C), jnp.float32),
        "ln1_b": jnp.zeros((1, C), jnp.float32),
        "w_qkv": 0.02 * jax.random.normal(ks[0], (C, 3 * C), jnp.float32),
        "b_qkv": jnp.zeros((1, 3 * C), jnp.float32),
        "w_ap":  0.02 * jax.random.normal(ks[1], (C, C), jnp.float32),
        "b_ap":  jnp.zeros((1, C), jnp.float32),
        "ln2_g": jnp.ones((1, C), jnp.float32),
        "ln2_b": jnp.zeros((1, C), jnp.float32),
        "w_fc":  0.02 * jax.random.normal(ks[2], (C, 4 * C), jnp.float32),
        "b_fc":  jnp.zeros((1, 4 * C), jnp.float32),
        "w_mp":  0.02 * jax.random.normal(ks[3], (4 * C, C), jnp.float32),
        "b_mp":  jnp.zeros((1, C), jnp.float32),
    }

    x = jax.random.normal(ks[4], (B, T, C), jnp.float32)
    ref = reference_block(x, params, n_head)

    # f32 compute path: tight correctness check (exact reciprocal).
    out_f32 = jax.block_until_ready(
        gpt2_block(x, params, n_head, compute_dtype=jnp.float32))
    assert out_f32.shape == (B, T, C)
    assert jnp.allclose(out_f32, ref, atol=2e-3, rtol=2e-3), "f32 mismatch vs reference"

    # bf16 MXU-input path (f32 accumulation / stats): looser check.
    out_bf16 = jax.block_until_ready(
        gpt2_block(x, params, n_head, compute_dtype=jnp.bfloat16))
    assert out_bf16.shape == (B, T, C)
    assert jnp.allclose(out_bf16.astype(jnp.float32), ref,
                        atol=3e-2, rtol=3e-2), "bf16 mismatch vs reference"

    print("KERNEL_OK")
</pallas_src>

<mosaic_0001>
module attributes {stable_mosaic.version = 11 : i64} {
  func.func @qkv_kernel(%arg0: i32, %arg1: i32, %arg2: memref<1x8x32xf32, #tpu.memory_space<vmem>>, %arg3: memref<1x32xf32, #tpu.memory_space<vmem>>, %arg4: memref<1x32xf32, #tpu.memory_space<vmem>>, %arg5: memref<32x96xf32, #tpu.memory_space<vmem>>, %arg6: memref<1x96xf32, #tpu.memory_space<vmem>>, %arg7: memref<1x12x8x8xf32, #tpu.memory_space<vmem>>) attributes {dimension_semantics = [#tpu.dimension_semantics<parallel>, #tpu.dimension_semantics<parallel>], iteration_bounds = array<i64: 2, 1>, scalar_prefetch = 0 : i64, scratch_operands = 0 : i64, tpu.core_type = #tpu.core_type<tc>, window_params = [{transform_indices = @transform_0, window_bounds = array<i64: 1, 8, 32>}, {pipeline_mode = #tpu.pipeline_mode<synchronous>, transform_indices = @transform_1, window_bounds = array<i64: 1, 32>}, {pipeline_mode = #tpu.pipeline_mode<synchronous>, transform_indices = @transform_2, window_bounds = array<i64: 1, 32>}, {pipeline_mode = #tpu.pipeline_mode<synchronous>, transform_indices = @transform_3, window_bounds = array<i64: 32, 96>}, {pipeline_mode = #tpu.pipeline_mode<synchronous>, transform_indices = @transform_4, window_bounds = array<i64: 1, 96>}, {transform_indices = @transform_5, window_bounds = array<i64: 1, 12, 8, 8>}]} {
    %c0 = arith.constant 0 : index
    %c0_0 = arith.constant 0 : index
    %c0_1 = arith.constant 0 : index
    %0 = vector.load %arg2[%c0, %c0_0, %c0_1] : memref<1x8x32xf32, #tpu.memory_space<vmem>>, vector<1x8x32xf32>
    %1 = vector.shape_cast %0 : vector<1x8x32xf32> to vector<8x32xf32>
    %c0_2 = arith.constant 0 : index
    %c0_3 = arith.constant 0 : index
    %2 = vector.load %arg3[%c0_2, %c0_3] : memref<1x32xf32, #tpu.memory_space<vmem>>, vector<1x32xf32>
    %c0_4 = arith.constant 0 : index
    %c0_5 = arith.constant 0 : index
    %3 = vector.load %arg4[%c0_4, %c0_5] : memref<1x32xf32, #tpu.memory_space<vmem>>, vector<1x32xf32>
    %cst = arith.constant dense<0.000000e+00> : vector<8xf32>
    %4 = vector.multi_reduction <add>, %1, %cst [1] : vector<8x32xf32> to vector<8xf32>
    %5 = vector.shape_cast %4 : vector<8xf32> to vector<8x1xf32>
    %cst_6 = arith.constant 3.200000e+01 : f32
    %6 = vector.broadcast %cst_6 : f32 to vector<8x1xf32>
    %7 = arith.divf %5, %6 : vector<8x1xf32>
    %8 = vector.broadcast %7 : vector<8x1xf32> to vector<8x32xf32>
    %9 = arith.subf %1, %8 : vector<8x32xf32>
    %10 = arith.mulf %9, %9 : vector<8x32xf32>
    %cst_7 = arith.constant dense<0.000000e+00> : vector<8xf32>
    %11 = vector.multi_reduction <add>, %10, %cst_7 [1] : vector<8x32xf32> to vector<8xf32>
    %12 = vector.shape_cast %11 : vector<8xf32> to vector<8x1xf32>
    %cst_8 = arith.constant 3.200000e+01 : f32
    %13 = vector.broadcast %cst_8 : f32 to vector<8x1xf32>
    %14 = arith.divf %12, %13 : vector<8x1xf32>
    %cst_9 = arith.constant 9.99999974E-6 : f32
    %15 = vector.broadcast %cst_9 : f32 to vector<8x1xf32>
    %16 = arith.addf %14, %15 : vector<8x1xf32>
    %17 = math.rsqrt %16 : vector<8x1xf32>
    %18 = vector.broadcast %17 : vector<8x1xf32> to vector<8x32xf32>
    %19 = arith.mulf %9, %18 : vector<8x32xf32>
    %20 = vector.broadcast %2 : vector<1x32xf32> to vector<8x32xf32>
    %21 = arith.mulf %19, %20 : vector<8x32xf32>
    %22 = vector.broadcast %3 : vector<1x32xf32> to vector<8x32xf32>
    %23 = arith.addf %21, %22 : vector<8x32xf32>
    %c0_10 = arith.constant 0 : index
    %c0_11 = arith.constant 0 : index
    %24 = vector.load %arg5[%c0_10, %c0_11] : memref<32x96xf32, #tpu.memory_space<vmem>>, vector<32x96xf32>
    %cst_12 = arith.constant dense<0.000000e+00> : vector<8x96xf32>
    %25 = tpu.matmul %23, %24, %cst_12 {dimension_numbers = #tpu.dot_dimension_numbers<[1], [0], [0], [1], [0, 0, 1, 1], [], []>} : vector<8x32xf32>, vector<32x96xf32>, vector<8x96xf32> -> vector<8x96xf32>
    %c0_13 = arith.constant 0 : index
    %c0_14 = arith.constant 0 : index
    %26 = vector.load %arg6[%c0_13, %c0_14] : memref<1x96xf32, #tpu.memory_space<vmem>>, vector<1x96xf32>
    %27 = vector.broadcast %26 : vector<1x96xf32> to vector<8x96xf32>
    %28 = arith.addf %25, %27 : vector<8x96xf32>
    %29 = vector.shape_cast %28 : vector<8x96xf32> to vector<8x12x8xf32>
    %30 = tpu.transpose %29, [1, 0, 2] : vector<8x12x8xf32> -> vector<12x8x8xf32>
    %c0_15 = arith.constant 0 : index
    %c0_16 = arith.constant 0 : index
    %c0_17 = arith.constant 0 : index
    %c0_18 = arith.constant 0 : index
    %31 = vector.load %arg7[%c0_15, %c0_16, %c0_17, %c0_18] : memref<1x12x8x8xf32, #tpu.memory_space<vmem>>, vector<1x12x8x8xf32>
    %32 = vector.shape_cast %31 : vector<1x12x8x8xf32> to vector<12x8x8xf32>
    %33 = vector.shape_cast %30 : vector<12x8x8xf32> to vector<1x12x8x8xf32>
    tpu.vector_store %arg7[%c0_15, %c0_16, %c0_17, %c0_18], %33 {strides = array<i32>} : memref<1x12x8x8xf32, #tpu.memory_space<vmem>>, vector<1x12x8x8xf32>,
    return
  }
  func.func @transform_0(%arg0: i32, %arg1: i32) -> (i32, i32, i32) {
    %c0_i32 = arith.constant 0 : i32
    %c0_i32_0 = arith.constant 0 : i32
    return %arg0, %arg1, %c0_i32 : i32, i32, i32
  }
  func.func @transform_1(%arg0: i32, %arg1: i32) -> (i32, i32) {
    %c0_i32 = arith.constant 0 : i32
    %c0_i32_0 = arith.constant 0 : i32
    %c0_i32_1 = arith.constant 0 : i32
    return %c0_i32, %c0_i32_0 : i32, i32
  }
  func.func @transform_2(%arg0: i32, %arg1: i32) -> (i32, i32) {
    %c0_i32 = arith.constant 0 : i32
    %c0_i32_0 = arith.constant 0 : i32
    %c0_i32_1 = arith.constant 0 : i32
    return %c0_i32, %c0_i32_0 : i32, i32
  }
  func.func @transform_3(%arg0: i32, %arg1: i32) -> (i32, i32) {
    %c0_i32 = arith.constant 0 : i32
    %c0_i32_0 = arith.constant 0 : i32
    %c0_i32_1 = arith.constant 0 : i32
    return %c0_i32, %c0_i32_0 : i32, i32
  }
  func.func @transform_4(%arg0: i32, %arg1: i32) -> (i32, i32) {
    %c0_i32 = arith.constant 0 : i32
    %c0_i32_0 = arith.constant 0 : i32
    %c0_i32_1 = arith.constant 0 : i32
    return %c0_i32, %c0_i32_0 : i32, i32
  }
  func.func @transform_5(%arg0: i32, %arg1: i32) -> (i32, i32, i32, i32) {
    %c0_i32 = arith.constant 0 : i32
    %c0_i32_0 = arith.constant 0 : i32
    %c0_i32_1 = arith.constant 0 : i32
    return %arg0, %c0_i32, %arg1, %c0_i32_0 : i32, i32, i32, i32
  }
}

module attributes {stable_mosaic.version = 11 : i64} {
  func.func @qkv_kernel(%arg0: i32, %arg1: i32, %arg2: memref<1x8x32xf32, #tpu.memory_space<vmem>>, %arg3: memref<1x32xf32, #tpu.memory_space<vmem>>, %arg4: memref<1x32xf32, #tpu.memory_space<vmem>>, %arg5: memref<32x96xf32, #tpu.memory_space<vmem>>, %arg6: memref<1x96xf32, #tpu.memory_space<vmem>>, %arg7: memref<1x12x8x8xf32, #tpu.memory_space<vmem>>) attributes {dimension_semantics = [#tpu.dimension_semantics<parallel>, #tpu.dimension_semantics<parallel>], iteration_bounds = array<i64: 2, 1>, scalar_prefetch = 0 : i64, scratch_operands = 0 : i64, tpu.core_type = #tpu.core_type<tc>, window_params = [{transform_indices = @transform_0, window_bounds = array<i64: 1, 8, 32>}, {pipeline_mode = #tpu.pipeline_mode<synchronous>, transform_indices = @transform_1, window_bounds = array<i64: 1, 32>}, {pipeline_mode = #tpu.pipeline_mode<synchronous>, transform_indices = @transform_2, window_bounds = array<i64: 1, 32>}, {pipeline_mode = #tpu.pipeline_mode<synchronous>, transform_indices = @transform_3, window_bounds = array<i64: 32, 96>}, {pipeline_mode = #tpu.pipeline_mode<synchronous>, transform_indices = @transform_4, window_bounds = array<i64: 1, 96>}, {transform_indices = @transform_5, window_bounds = array<i64: 1, 12, 8, 8>}]} {
    %c0 = arith.constant 0 : index
    %c0_0 = arith.constant 0 : index
    %c0_1 = arith.constant 0 : index
    %0 = vector.load %arg2[%c0, %c0_0, %c0_1] : memref<1x8x32xf32, #tpu.memory_space<vmem>>, vector<1x8x32xf32>
    %1 = vector.shape_cast %0 : vector<1x8x32xf32> to vector<8x32xf32>
    %c0_2 = arith.constant 0 : index
    %c0_3 = arith.constant 0 : index
    %2 = vector.load %arg3[%c0_2, %c0_3] : memref<1x32xf32, #tpu.memory_space<vmem>>, vector<1x32xf32>
    %c0_4 = arith.constant 0 : index
    %c0_5 = arith.constant 0 : index
    %3 = vector.load %arg4[%c0_4, %c0_5] : memref<1x32xf32, #tpu.memory_space<vmem>>, vector<1x32xf32>
    %cst = arith.constant dense<0.000000e+00> : vector<8xf32>
    %4 = vector.multi_reduction <add>, %1, %cst [1] : vector<8x32xf32> to vector<8xf32>
    %5 = vector.shape_cast %4 : vector<8xf32> to vector<8x1xf32>
    %cst_6 = arith.constant 3.200000e+01 : f32
    %6 = vector.broadcast %cst_6 : f32 to vector<8x1xf32>
    %7 = arith.divf %5, %6 : vector<8x1xf32>
    %8 = vector.broadcast %7 : vector<8x1xf32> to vector<8x32xf32>
    %9 = arith.subf %1, %8 : vector<8x32xf32>
    %10 = arith.mulf %9, %9 : vector<8x32xf32>
    %cst_7 = arith.constant dense<0.000000e+00> : vector<8xf32>
    %11 = vector.multi_reduction <add>, %10, %cst_7 [1] : vector<8x32xf32> to vector<8xf32>
    %12 = vector.shape_cast %11 : vector<8xf32> to vector<8x1xf32>
    %cst_8 = arith.constant 3.200000e+01 : f32
    %13 = vector.broadcast %cst_8 : f32 to vector<8x1xf32>
    %14 = arith.divf %12, %13 : vector<8x1xf32>
    %cst_9 = arith.constant 9.99999974E-6 : f32
    %15 = vector.broadcast %cst_9 : f32 to vector<8x1xf32>
    %16 = arith.addf %14, %15 : vector<8x1xf32>
    %17 = math.rsqrt %16 : vector<8x1xf32>
    %18 = vector.broadcast %17 : vector<8x1xf32> to vector<8x32xf32>
    %19 = arith.mulf %9, %18 : vector<8x32xf32>
    %20 = vector.broadcast %2 : vector<1x32xf32> to vector<8x32xf32>
    %21 = arith.mulf %19, %20 : vector<8x32xf32>
    %22 = vector.broadcast %3 : vector<1x32xf32> to vector<8x32xf32>
    %23 = arith.addf %21, %22 : vector<8x32xf32>
    %c0_10 = arith.constant 0 : index
    %c0_11 = arith.constant 0 : index
    %24 = vector.load %arg5[%c0_10, %c0_11] : memref<32x96xf32, #tpu.memory_space<vmem>>, vector<32x96xf32>
    %cst_12 = arith.constant dense<0.000000e+00> : vector<8x96xf32>
    %25 = tpu.matmul %23, %24, %cst_12 {dimension_numbers = #tpu.dot_dimension_numbers<[1], [0], [0], [1], [0, 0, 1, 1], [], []>} : vector<8x32xf32>, vector<32x96xf32>, vector<8x96xf32> -> vector<8x96xf32>
    %c0_13 = arith.constant 0 : index
    %c0_14 = arith.constant 0 : index
    %26 = vector.load %arg6[%c0_13, %c0_14] : memref<1x96xf32, #tpu.memory_space<vmem>>, vector<1x96xf32>
    %27 = vector.broadcast %26 : vector<1x96xf32> to vector<8x96xf32>
    %28 = arith.addf %25, %27 : vector<8x96xf32>
    %29 = vector.shape_cast %28 : vector<8x96xf32> to vector<8x12x8xf32>
    %30 = tpu.transpose %29, [1, 0, 2] : vector<8x12x8xf32> -> vector<12x8x8xf32>
    %c0_15 = arith.constant 0 : index
    %c0_16 = arith.constant 0 : index
    %c0_17 = arith.constant 0 : index
    %c0_18 = arith.constant 0 : index
    %31 = vector.load %arg7[%c0_15, %c0_16, %c0_17, %c0_18] : memref<1x12x8x8xf32, #tpu.memory_space<vmem>>, vector<1x12x8x8xf32>
    %32 = vector.shape_cast %31 : vector<1x12x8x8xf32> to vector<12x8x8xf32>
    %33 = vector.shape_cast %30 : vector<12x8x8xf32> to vector<1x12x8x8xf32>
    tpu.vector_store %arg7[%c0_15, %c0_16, %c0_17, %c0_18], %33 {strides = array<i32>} : memref<1x12x8x8xf32, #tpu.memory_space<vmem>>, vector<1x12x8x8xf32>,
    return
  }
  func.func @transform_0(%arg0: i32, %arg1: i32) -> (i32, i32, i32) {
    %c0_i32 = arith.constant 0 : i32
    %c0_i32_0 = arith.constant 0 : i32
    return %arg0, %arg1, %c0_i32 : i32, i32, i32
  }
  func.func @transform_1(%arg0: i32, %arg1: i32) -> (i32, i32) {
    %c0_i32 = arith.constant 0 : i32
    %c0_i32_0 = arith.constant 0 : i32
    %c0_i32_1 = arith.constant 0 : i32
    return %c0_i32, %c0_i32_0 : i32, i32
  }
  func.func @transform_2(%arg0: i32, %arg1: i32) -> (i32, i32) {
    %c0_i32 = arith.constant 0 : i32
    %c0_i32_0 = arith.constant 0 : i32
    %c0_i32_1 = arith.constant 0 : i32
    return %c0_i32, %c0_i32_0 : i32, i32
  }
  func.func @transform_3(%arg0: i32, %arg1: i32) -> (i32, i32) {
    %c0_i32 = arith.constant 0 : i32
    %c0_i32_0 = arith.constant 0 : i32
    %c0_i32_1 = arith.constant 0 : i32
    return %c0_i32, %c0_i32_0 : i32, i32
  }
  func.func @transform_4(%arg0: i32, %arg1: i32) -> (i32, i32) {
    %c0_i32 = arith.constant 0 : i32
    %c0_i32_0 = arith.constant 0 : i32
    %c0_i32_1 = arith.constant 0 : i32
    return %c0_i32, %c0_i32_0 : i32, i32
  }
  func.func @transform_5(%arg0: i32, %arg1: i32) -> (i32, i32, i32, i32) {
    %c0_i32 = arith.constant 0 : i32
    %c0_i32_0 = arith.constant 0 : i32
    %c0_i32_1 = arith.constant 0 : i32
    return %arg0, %c0_i32, %arg1, %c0_i32_0 : i32, i32, i32, i32
  }
}

</mosaic_0001>

<llo_original>
// kernel: tpu_custom_call.1
$region0: #{tpu_custom_call.1}
  #allocation0 [shape = 'u32[]', space=smem, size = 0x4, offset = 0x4, fixed_abs, tag = 'smem constant byte address 0x4 - core index']
  #allocation1 [shape = 'u32[144,128]{1,0:T(1,128)}', space=vmem, size = 0x12000, scoped, tag = 'internal scratch']
  %s0 = inlined_call_operand.hbm [shape: f32[2,8,32], index: 0, kind: input, shape index: {}]
  %s1 = inlined_call_operand.hbm [shape: f32[1,32], index: 1, kind: input, shape index: {}]
  %s2 = inlined_call_operand.hbm [shape: f32[1,32], index: 2, kind: input, shape index: {}]
  %s3 = inlined_call_operand.hbm [shape: f32[32,96], index: 3, kind: input, shape index: {}]
  %s4 = inlined_call_operand.hbm [shape: f32[1,96], index: 4, kind: input, shape index: {}]
  %s5 = inlined_call_operand.hbm [shape: f32[2,12,8,8], index: 5, kind: output, shape index: {}]
  %s6 = sld [smem:[#allocation0]]
  $region73: #{tpu_custom_call.1} parent=0
    _
  %s8 = ssub.s32 1, %s6
  %s9 = scalar_select 0, %s8, %s6
  $region1: #{tpu_custom_call.1} parent=0
    #allocation2 [shape = 'u8[8192]{0}', space=vmem, size = 0x2000, scoped, tag = 'input window, operand 0']
    #allocation3 [shape = 's32[2]{0}', space=sflag, size = 0x8, scoped, tag = 'scoped memory for tpu_custom_call.1']
    #allocation4 [shape = 's32[2]{0}', space=sflag, size = 0x8, scoped, tag = 'scoped memory for tpu_custom_call.1']
    #allocation5 [shape = 'u8[512]{0}', space=vmem, size = 0x400, scoped, tag = 'input window, operand 1, single buffered']
    #allocation6 [shape = 's32[1]{0}', space=sflag, size = 0x4, scoped, tag = 'scoped memory for tpu_custom_call.1']
    #allocation7 [shape = 'u8[512]{0}', space=vmem, size = 0x400, scoped, tag = 'input window, operand 2, single buffered']
    #allocation8 [shape = 'u8[16384]{0}', space=vmem, size = 0x4000, scoped, tag = 'input window, operand 3, single buffered']
    #allocation9 [shape = 's32[1]{0}', space=sflag, size = 0x4, scoped, tag = 'scoped memory for tpu_custom_call.1']
    #allocation10 [shape = 'u8[512]{0}', space=vmem, size = 0x400, scoped, tag = 'input window, operand 4, single buffered']
    #allocation11 [shape = 'u8[98304]{0}', space=vmem, size = 0x18000, scoped, tag = 'output window, operand 0']
    %10 = vsyncpa [#allocation3], 0
    %s11 = scalar_lea.sflag [#allocation3], 1
    %12 = vsyncpa %s11, 0
    %13 = vsyncpa [#allocation6], 0
    %14 = vsyncpa [#allocation9], 0
    %15 = vsyncpa [#allocation4], 0
    %s16 = scalar_lea.sflag [#allocation4], 1
    %17 = vsyncpa %s16, 0
    loop: start=0, step=1, limit=4
    $region2: #{tpu_custom_call.1} parent=1 // loop_pre_header
      _
    $region3: #{tpu_custom_call.1} parent=1 // loop_header
      %s19 = sphi 0, %s23
      %p20 = scmp.ge.s32.totalorder %s19, 4
      %s26 = sphi 0, %s38
      %s27 = sphi 0, %s34
      %s28 = sphi 0, %s26
      %s29 = sphi 0, %s27
      %s30 = sphi 0, %s28
      %s31 = sphi 0, %s29
      %s43 = sphi 0, %s45
      %s46 = sphi 0, %s43
      %s47 = sphi 0, %s46
      %s63 = sphi 0, %s47
      %s67 = sphi 0, %s67
      %s69 = sphi 0, %s67
      %s70 = sphi 0, %s69
      %s84 = sphi 0, %s70
      %s88 = sphi 0, %s88
      %s90 = sphi 0, %s88
      %s91 = sphi 0, %s90
      %s105 = sphi 0, %s91
      %s109 = sphi 0, %s109
      %s111 = sphi 0, %s109
      %s112 = sphi 0, %s111
      %s126 = sphi 0, %s112
      %s130 = sphi 0, %s130
      %s132 = sphi 0, %s130
      %s133 = sphi 0, %s132
      %s147 = sphi 0, %s133
      %s155 = sphi 0, %s157
      %s158 = sphi 0, %s155
      %s159 = sphi 0, %s158
      %s175 = sphi 0, %s159
    $region4: #{tpu_custom_call.1} parent=1 // loop_header_branch
      %22 = sbr.rel (%p20) target = $region8
    $region5: #{tpu_custom_call.1} parent=1 // loop_body
      %s24 = ssub.s32 %s19, 1
      %s25 = ssub.s32 %s19, 2
      %s32 = sadd.s32 1, %s27
      %p33 = scmp.ge.s32.totalorder %s32, 1
      %s34 = scalar_select %p33, 0, %s32
      %s35 = sadd.s32 1, %s26
      %s36 = scalar_select %p33, %s35, %s26
      %p37 = scmp.ge.s32.totalorder %s36, 2
      %s38 = scalar_select %p37, 0, %s36
      %s39 = ssub.s32 %s26, %s38
      %s40 = ssub.s32 %s27, %s34
      %s41 = sor.u32 %s39, %s40
      %p42 = scmp.eq.s32.totalorder %s41, 0
      %s44 = sadd.s32 %s43, 1
      %s45 = scalar_select %p42, %s43, %s44
      %p48 = pneg %p42
      %p49 = scmp.eq.s32.totalorder %s19, 1
      %p50 = por %p48, %p49
      %p51 = scmp.ne.s32.totalorder %s43, %s46
      %p52 = scmp.eq.s32.totalorder %s19, 0
      %p53 = por %p51, %p52
      %p54 = scmp.ne.s32.totalorder %s43, %s46
      %p55 = scmp.eq.s32.totalorder %s24, 1
      %p56 = por %p54, %p55
      %p57 = scmp.ne.s32.totalorder %s46, %s47
      %p58 = scmp.eq.s32.totalorder %s24, 0
      %p59 = por %p57, %p58
      %p60 = scmp.ne.s32.totalorder %s46, %s47
      %p61 = scmp.eq.s32.totalorder %s25, 1
      %p62 = por %p60, %p61
      %p64 = scmp.ne.s32.totalorder %s47, %s63
      %p65 = scmp.eq.s32.totalorder %s25, 0
      %p66 = por %p64, %p65
      %s68 = sadd.s32 %s67, 1
      %p71 = scmp.eq.s32.totalorder %s19, 1
      %p72 = scmp.ne.s32.totalorder %s67, %s69
      %p73 = scmp.eq.s32.totalorder %s19, 0
      %p74 = por %p72, %p73
      %p75 = scmp.ne.s32.totalorder %s67, %s69
      %p76 = scmp.eq.s32.totalorder %s24, 1
      %p77 = por %p75, %p76
      %p78 = scmp.ne.s32.totalorder %s69, %s70
      %p79 = scmp.eq.s32.totalorder %s24, 0
      %p80 = por %p78, %p79
      %p81 = scmp.ne.s32.totalorder %s69, %s70
      %p82 = scmp.eq.s32.totalorder %s25, 1
      %p83 = por %p81, %p82
      %p85 = scmp.ne.s32.totalorder %s70, %s84
      %p86 = scmp.eq.s32.totalorder %s25, 0
      %p87 = por %p85, %p86
      %s89 = sadd.s32 %s88, 1
      %p92 = scmp.eq.s32.totalorder %s19, 1
      %p93 = scmp.ne.s32.totalorder %s88, %s90
      %p94 = scmp.eq.s32.totalorder %s19, 0
      %p95 = por %p93, %p94
      %p96 = scmp.ne.s32.totalorder %s88, %s90
      %p97 = scmp.eq.s32.totalorder %s24, 1
      %p98 = por %p96, %p97
      %p99 = scmp.ne.s32.totalorder %s90, %s91
      %p100 = scmp.eq.s32.totalorder %s24, 0
      %p101 = por %p99, %p100
      %p102 = scmp.ne.s32.totalorder %s90, %s91
      %p103 = scmp.eq.s32.totalorder %s25, 1
      %p104 = por %p102, %p103
      %p106 = scmp.ne.s32.totalorder %s91, %s105
      %p107 = scmp.eq.s32.totalorder %s25, 0
      %p108 = por %p106, %p107
      %s110 = sadd.s32 %s109, 1
      %p113 = scmp.eq.s32.totalorder %s19, 1
      %p114 = scmp.ne.s32.totalorder %s109, %s111
      %p115 = scmp.eq.s32.totalorder %s19, 0
      %p116 = por %p114, %p115
      %p117 = scmp.ne.s32.totalorder %s109, %s111
      %p118 = scmp.eq.s32.totalorder %s24, 1
      %p119 = por %p117, %p118
      %p120 = scmp.ne.s32.totalorder %s111, %s112
      %p121 = scmp.eq.s32.totalorder %s24, 0
      %p122 = por %p120, %p121
      %p123 = scmp.ne.s32.totalorder %s111, %s112
      %p124 = scmp.eq.s32.totalorder %s25, 1
      %p125 = por %p123, %p124
      %p127 = scmp.ne.s32.totalorder %s112, %s126
      %p128 = scmp.eq.s32.totalorder %s25, 0
      %p129 = por %p127, %p128
      %s131 = sadd.s32 %s130, 1
      %p134 = scmp.eq.s32.totalorder %s19, 1
      %p135 = scmp.ne.s32.totalorder %s130, %s132
      %p136 = scmp.eq.s32.totalorder %s19, 0
      %p137 = por %p135, %p136
      %p138 = scmp.ne.s32.totalorder %s130, %s132
      %p139 = scmp.eq.s32.totalorder %s24, 1
      %p140 = por %p138, %p139
      %p141 = scmp.ne.s32.totalorder %s132, %s133
      %p142 = scmp.eq.s32.totalorder %s24, 0
      %p143 = por %p141, %p142
      %p144 = scmp.ne.s32.totalorder %s132, %s133
      %p145 = scmp.eq.s32.totalorder %s25, 1
      %p146 = por %p144, %p145
      %p148 = scmp.ne.s32.totalorder %s133, %s147
      %p149 = scmp.eq.s32.totalorder %s25, 0
      %p150 = por %p148, %p149
      %s151 = ssub.s32 %s26, %s38
      %s152 = ssub.s32 %s27, %s34
      %s153 = sor.u32 %s151, %s152
      %p154 = scmp.eq.s32.totalorder %s153, 0
      %s156 = sadd.s32 %s155, 1
      %s157 = scalar_select %p154, %s155, %s156
      %p160 = pneg %p154
      %p161 = scmp.eq.s32.totalorder %s19, 1
      %p162 = por %p160, %p161
      %p163 = scmp.ne.s32.totalorder %s155, %s158
      %p164 = scmp.eq.s32.totalorder %s19, 0
      %p165 = por %p163, %p164
      %p166 = scmp.ne.s32.totalorder %s155, %s158
      %p167 = scmp.eq.s32.totalorder %s24, 1
      %p168 = por %p166, %p167
      %p169 = scmp.ne.s32.totalorder %s158, %s159
      %p170 = scmp.eq.s32.totalorder %s24, 0
      %p171 = por %p169, %p170
      %p172 = scmp.ne.s32.totalorder %s158, %s159
      %p173 = scmp.eq.s32.totalorder %s25, 1
      %p174 = por %p172, %p173
      %p176 = scmp.ne.s32.totalorder %s159, %s175
      %p177 = scmp.eq.s32.totalorder %s25, 0
      %p178 = por %p176, %p177
      %p179 = scmp.le.s32.totalorder 1, %s19
      %p180 = scmp.lt.s32.totalorder %s19, 3
      %p181 = pnand %p179, %p180
      %p182 = pneg %p181
      // Predicated region
      $region9: #{tpu_custom_call.1} parent=5 // pred_check
        _
      $region10: #{tpu_custom_call.1} parent=5 // pred_check_branch
        %184 = sbr.rel (%p181) target = $region12
      $region11: #{tpu_custom_call.1} parent=5 // pred_region
        %s185 = ssub.s32 %s19, 1
        // Predicated region
        $region13: #{tpu_custom_call.1} parent=11 // pred_check
          %p186 = pneg %p80
        $region14: #{tpu_custom_call.1} parent=11 // pred_check_branch
          %188 = sbr.rel (%p186) target = $region16
        $region15: #{tpu_custom_call.1} parent=11 // pred_region
          %s190 = ssub.s32 16, 16
          %191 = vsyncadd [#allocation6], %s190
          %s193 = sshll.u32 [#allocation5], 4
          %s194 = int_to_ptr.vmem [resolvable:$true] %s193
          %196 = dma.hbm_to_vmem [thread:$0]  %s1, 16, %s194, [#allocation6]
        $region16: #{tpu_custom_call.1} parent=11 // pred_fallthru
          _
        // Predicated region
        $region17: #{tpu_custom_call.1} parent=11 // pred_check
          %p197 = pneg %p101
        $region18: #{tpu_custom_call.1} parent=11 // pred_check_branch
          %199 = sbr.rel (%p197) target = $region20
        $region19: #{tpu_custom_call.1} parent=11 // pred_region
          %s201 = ssub.s32 16, 16
          %202 = vsyncadd [#allocation6], %s201
          %s204 = sshll.u32 [#allocation7], 4
          %s205 = int_to_ptr.vmem [resolvable:$true] %s204
          %207 = dma.hbm_to_vmem [thread:$0]  %s2, 16, %s205, [#allocation6]
        $region20: #{tpu_custom_call.1} parent=11 // pred_fallthru
          _
        // Predicated region
        $region21: #{tpu_custom_call.1} parent=11 // pred_check
          %p208 = pneg %p122
        $region22: #{tpu_custom_call.1} parent=11 // pred_check_branch
          %210 = sbr.rel (%p208) target = $region24
        $region23: #{tpu_custom_call.1} parent=11 // pred_region
          %s212 = ssub.s32 512, 512
          %213 = vsyncadd [#allocation9], %s212
          %s214 = sshll.u32 [#allocation8], 4
          %s215 = int_to_ptr.vmem [resolvable:$true] %s214
          %220 = dma.hbm_to_vmem [thread:$0]  %s3, 512, %s215, [#allocation9], 128, 128, 8
        $region24: #{tpu_custom_call.1} parent=11 // pred_fallthru
          _
        // Predicated region
        $region25: #{tpu_custom_call.1} parent=11 // pred_check
          %p221 = pneg %p143
        $region26: #{tpu_custom_call.1} parent=11 // pred_check_branch
          %223 = sbr.rel (%p221) target = $region28
        $region27: #{tpu_custom_call.1} parent=11 // pred_region
          %s225 = ssub.s32 16, 16
          %226 = vsyncadd [#allocation9], %s225
          %s228 = sshll.u32 [#allocation10], 4
          %s229 = int_to_ptr.vmem [resolvable:$true] %s228
          %231 = dma.hbm_to_vmem [thread:$0]  %s4, 16, %s229, [#allocation9]
        $region28: #{tpu_custom_call.1} parent=11 // pred_fallthru
          _
      $region12: #{tpu_custom_call.1} parent=5 // pred_fallthru
        _
      %p232 = scmp.lt.s32.totalorder %s19, 2
      // Predicated region
      $region29: #{tpu_custom_call.1} parent=5 // pred_check
        %p233 = pneg %p232
      $region30: #{tpu_custom_call.1} parent=5 // pred_check_branch
        %235 = sbr.rel (%p233) target = $region32
      $region31: #{tpu_custom_call.1} parent=5 // pred_region
        // Predicated region
        $region33: #{tpu_custom_call.1} parent=31 // pred_check
          %p236 = pneg %p53
        $region34: #{tpu_custom_call.1} parent=31 // pred_check_branch
          %238 = sbr.rel (%p236) target = $region36
        $region35: #{tpu_custom_call.1} parent=31 // pred_region
          %s239 = sand.u32 %s43, 1
          %s240 = scalar_lea.sflag [#allocation3], %s239
          %s241 = sand.u32 %s43, 1
          %s242 = smul.addr %s241, 8
          %s243 = scalar_lea.vmem [#allocation2], %s242
          %s245 = ssub.s32 128, 128
          %246 = vsyncadd %s240, %s245
          %s247 = sadd.s32 %s27, %s26
          %s248 = smul.addr %s247, 128
          %s249 = scalar_lea.hbm %s0, %s248
          %s251 = sshll.u32 %s243, 4
          %s252 = int_to_ptr.vmem [resolvable:$true] %s251
          %254 = dma.hbm_to_vmem [thread:$0]  %s249, 128, %s252, %s240
        $region36: #{tpu_custom_call.1} parent=31 // pred_fallthru
          _
      $region32: #{tpu_custom_call.1} parent=5 // pred_fallthru
        _
      %p255 = scmp.le.s32.totalorder 1, %s19
      %p256 = scmp.lt.s32.totalorder %s19, 3
      %p257 = pnand %p255, %p256
      %p258 = pneg %p257
      // Predicated region
      $region37: #{tpu_custom_call.1} parent=5 // pred_check
        _
      $region38: #{tpu_custom_call.1} parent=5 // pred_check_branch
        %260 = sbr.rel (%p257) target = $region40
      $region39: #{tpu_custom_call.1} parent=5 // pred_region
        %s261 = ssub.s32 %s19, 1
        %s262 = sand.u32 %s46, 1
        %s263 = scalar_lea.sflag [#allocation3], %s262
        %s264 = sand.u32 %s46, 1
        %s265 = smul.addr %s264, 8
        %s266 = scalar_lea.vmem [#allocation2], %s265
        // Predicated region
        $region41: #{tpu_custom_call.1} parent=39 // pred_check
          %p267 = pneg %p59
        $region42: #{tpu_custom_call.1} parent=39 // pred_check_branch
          %269 = sbr.rel (%p267) target = $region44
        $region43: #{tpu_custom_call.1} parent=39 // pred_region
          %270 = dma.done %s263, 128
        $region44: #{tpu_custom_call.1} parent=39 // pred_fallthru
          _
        // Predicated region
        $region45: #{tpu_custom_call.1} parent=39 // pred_check
          %p271 = pneg %p80
        $region46: #{tpu_custom_call.1} parent=39 // pred_check_branch
          %273 = sbr.rel (%p271) target = $region48
        $region47: #{tpu_custom_call.1} parent=39 // pred_region
          %274 = dma.done [#allocation6], 16
        $region48: #{tpu_custom_call.1} parent=39 // pred_fallthru
          _
        // Predicated region
        $region49: #{tpu_custom_call.1} parent=39 // pred_check
          %p275 = pneg %p101
        $region50: #{tpu_custom_call.1} parent=39 // pred_check_branch
          %277 = sbr.rel (%p275) target = $region52
        $region51: #{tpu_custom_call.1} parent=39 // pred_region
          %278 = dma.done [#allocation6], 16
        $region52: #{tpu_custom_call.1} parent=39 // pred_fallthru
          _
        // Predicated region
        $region53: #{tpu_custom_call.1} parent=39 // pred_check
          %p279 = pneg %p122
        $region54: #{tpu_custom_call.1} parent=39 // pred_check_branch
          %281 = sbr.rel (%p279) target = $region56
        $region55: #{tpu_custom_call.1} parent=39 // pred_region
          %282 = dma.done [#allocation9], 512
        $region56: #{tpu_custom_call.1} parent=39 // pred_fallthru
          _
        // Predicated region
        $region57: #{tpu_custom_call.1} parent=39 // pred_check
          %p283 = pneg %p143
        $region58: #{tpu_custom_call.1} parent=39 // pred_check_branch
          %285 = sbr.rel (%p283) target = $region60
        $region59: #{tpu_custom_call.1} parent=39 // pred_region
          %286 = dma.done [#allocation9], 16
        $region60: #{tpu_custom_call.1} parent=39 // pred_fallthru
          _
        %s287 = sand.u32 %s46, 1
        %s288 = scalar_lea.sflag [#allocation3], %s287
        %s289 = sand.u32 %s46, 1
        %s290 = smul.addr %s289, 8
        %s291 = scalar_lea.vmem [#allocation2], %s290
        %p292 = pneg %p59
        %p293 = pneg %p56
        %p294 = pneg %p80
        %p295 = pneg %p77
        %p296 = pneg %p101
        %p297 = pneg %p98
        %p298 = pneg %p122
        %p299 = pneg %p119
        %p300 = pneg %p143
        %p301 = pneg %p140
        %p302 = pneg %p171
        %p303 = pneg %p168
        %s304 = sand.u32 %s158, 1
        %s305 = scalar_lea.sflag [#allocation4], %s304
        %s306 = sand.u32 %s158, 1
        %s307 = smul.addr %s306, 96
        %s308 = scalar_lea.vmem [#allocation11], %s307
        %v309 = vld [vmem:[%s266] sm:$0xff]
        %v310 = vld [vmem:[#allocation5] sm:$0x1]
        %v311 = vld [vmem:[#allocation7] sm:$0x1]
        %vm312 = vcmask 261120
        %v313 = vsel %vm312, %v309, 0.0
        %314 = vadd.xlane.f32.xlu0 %v313
        %v315 = vpop.xlane.xlu0 %314
        %v316 = vrcp.pop 32.0
        %v317 = vmul.f32 %v315, %v316
        %v318 = vsub.f32 %v309, %v317
        %v319 = vmul.f32 %v318, %v318
        %v320 = vsel %vm312, %v319, 0.0
        %321 = vadd.xlane.f32.xlu0 %v320
        %v322 = vpop.xlane.xlu0 %321
        %v323 = vmul.f32 %v322, %v316
        %v324 = vadd.f32 %v323, 1e-05
        %v325 = vrsqrt.pop %v324
        %v326 = vmul.f32 %v318, %v325
        %v328 = vlaneseq
        %v329 = vshrl.u32 %v328, 7
        %v330 = vsub.s32 0, %v329
        %v331 = vrot.slane %v310, %v330
        %v333 = vmul.f32 %v326, %v331
        %v335 = vlaneseq
        %v336 = vshrl.u32 %v335, 7
        %v337 = vsub.s32 0, %v336
        %v338 = vrot.slane %v311, %v337
        %v340 = vadd.f32 %v333, %v338
        %v341 = vld [vmem:[#allocation8] sm:$0xff]
        %v342 = vld [vmem:[#allocation8 + $0x8] sm:$0xff]
        %v343 = vld [vmem:[#allocation8 + $0x10] sm:$0xff]
        %v344 = vld [vmem:[#allocation8 + $0x18] sm:$0xff]
        %v345 = vld [vmem:[#allocation10] sm:$0x1]
        %v347 = vlaneseq
        %v348 = vshrl.u32 %v347, 7
        %v349 = vsub.s32 0, %v348
        %v350 = vrot.slane %v345, %v349
        %v353 = vsel %vm312, %v340, 0
        %355 = vmatprep.subr.mxu0 0.0
        %356 = vmatpush1.msra.mxu0 %v341
        %357 = vmatprep.subr.mxu0 0.0
        %358 = vmatpush1.msra.mxu0 %v342
        %359 = vmatprep.subr.mxu0 0.0
        %360 = vmatpush1.msra.mxu0 %v343
        %361 = vmatprep.subr.mxu0 0.0
        %362 = vmatpush1.msra.mxu0 %v344
        %363 = vmatprep.subr.mxu0 0.0
        %364 = vmatpush1.msra.mxu0 0.0
        %365 = vmatprep.subr.mxu0 0.0
        %366 = vmatpush1.msra.mxu0 0.0
        %367 = vmatprep.subr.mxu0 0.0
        %368 = vmatpush1.msra.mxu0 0.0
        %369 = vmatprep.subr.mxu0 0.0
        %370 = vmatpush1.msra.mxu0 0.0
        %371 = vmatprep.subr.mxu0 0.0
        %372 = vmatpush1.msra.mxu0 0.0
        %373 = vmatprep.subr.mxu0 0.0
        %374 = vmatpush1.msra.mxu0 0.0
        %375 = vmatprep.subr.mxu0 0.0
        %376 = vmatpush1.msra.mxu0 0.0
        %377 = vmatprep.subr.mxu0 0.0
        %378 = vmatpush1.msra.mxu0 0.0
        %379 = vmatprep.subr.mxu0 0.0
        %380 = vmatpush1.msra.mxu0 0.0
        %381 = vmatprep.subr.mxu0 0.0
        %382 = vmatpush1.msra.mxu0 0.0
        %383 = vmatprep.subr.mxu0 0.0
        %384 = vmatpush1.msra.mxu0 0.0
        %385 = vmatprep.subr.mxu0 0.0
        %386 = vmatpush1.msra.mxu0 0.0
        %387 = vmatprep.subr.mxu0 0.0
        %388 = vmatpush1.msra.mxu0 0.0
        %389 = vmatprep.subr.mxu0 0.0
        %390 = vmatpush1.msra.mxu0 0.0
        %391 = vmatprep.subr.mxu0 0.0
        %392 = vmatpush1.msra.mxu0 0.0
        %393 = vmatprep.subr.mxu0 0.0
        %394 = vmatpush1.msra.mxu0 0.0
        %395 = vmatprep.subr.mxu0 0.0
        %396 = vmatpush1.msra.mxu0 0.0
        %397 = vmatprep.subr.mxu0 0.0
        %398 = vmatpush1.msra.mxu0 0.0
        %399 = vmatprep.subr.mxu0 0.0
        %400 = vmatpush1.msra.mxu0 0.0
        %401 = vmatprep.subr.mxu0 0.0
        %402 = vmatpush1.msra.mxu0 0.0
        %403 = vmatprep.subr.mxu0 0.0
        %404 = vmatpush1.msra.mxu0 0.0
        %405 = vmatprep.subr.mxu0 0.0
        %406 = vmatpush1.msra.mxu0 0.0
        %407 = vmatprep.subr.mxu0 0.0
        %408 = vmatpush1.msra.mxu0 0.0
        %409 = vmatprep.subr.mxu0 0.0
        %410 = vmatpush1.msra.mxu0 0.0
        %411 = vmatprep.subr.mxu0 0.0
        %412 = vmatpush1.msra.mxu0 0.0
        %413 = vmatprep.subr.mxu0 0.0
        %414 = vmatpush1.msra.mxu0 0.0
        %415 = vmatprep.subr.mxu0 0.0
        %416 = vmatpush1.msra.mxu0 0.0
        %417 = vmatprep.subr.mxu0 0.0
        %418 = vmatpush1.msra.mxu0 0.0
        %419 = vmatprep.mubr.f32.mxu0 0.0
        %420 = vmatmul.mubr.f32.gmra.mrb[0].mxu0 %v353
        %v421 = vpop.f32.mrb[0].mxu0
        %v422 = vadd.f32 %v350, %v421
        %v423 = vpop.f32.mrb[0].mxu0
        %424 = vdwg.mxu0
        %426 = vrot.lane.b32.xlu0 %v422, 120
        %v427 = vpop.permute.xlu0 %426
        %429 = vrot.lane.b32.xlu0 %v422, 112
        %v430 = vpop.permute.xlu0 %429
        %432 = vrot.lane.b32.xlu0 %v422, 104
        %v433 = vpop.permute.xlu0 %432
        %435 = vrot.lane.b32.xlu0 %v422, 96
        %v436 = vpop.permute.xlu0 %435
        %438 = vrot.lane.b32.xlu0 %v422, 88
        %v439 = vpop.permute.xlu0 %438
        %441 = vrot.lane.b32.xlu0 %v422, 80
        %v442 = vpop.permute.xlu0 %441
        %444 = vrot.lane.b32.xlu0 %v422, 72
        %v445 = vpop.permute.xlu0 %444
        %447 = vrot.lane.b32.xlu0 %v422, 64
        %v448 = vpop.permute.xlu0 %447
        %450 = vrot.lane.b32.xlu0 %v422, 56
        %v451 = vpop.permute.xlu0 %450
        %453 = vrot.lane.b32.xlu0 %v422, 48
        %v454 = vpop.permute.xlu0 %453
        %456 = vrot.lane.b32.xlu0 %v422, 40
        %v457 = vpop.permute.xlu0 %456
        %v459 = vcombine.low %v422, %v430
        %v460 = vcombine.high %v422, %v430
        %v462 = vunpack.c.l.s4 1983009808
        %v463 = vunpack.c.0.s8 %v462
        %v464 = vlaneseq
        %v465 = vshrl.u32 %v464, 7
        %v466 = vsub.s32 %v463, %v465
        %v467 = vrot.slane %v459, %v466
        %v469 = vunpack.c.l.s4 1983009808
        %v470 = vunpack.c.0.s8 %v469
        %v471 = vlaneseq
        %v472 = vshrl.u32 %v471, 7
        %v473 = vsub.s32 %v470, %v472
        %v474 = vrot.slane %v460, %v473
        %v475 = vcombine.low %v427, %v433
        %v476 = vcombine.high %v427, %v433
        %v478 = vunpack.c.l.s4 1983009808
        %v479 = vunpack.c.0.s8 %v478
        %v480 = vlaneseq
        %v481 = vshrl.u32 %v480, 7
        %v482 = vsub.s32 %v479, %v481
        %v483 = vrot.slane %v475, %v482
        %v485 = vunpack.c.l.s4 1983009808
        %v486 = vunpack.c.0.s8 %v485
        %v487 = vlaneseq
        %v488 = vshrl.u32 %v487, 7
        %v489 = vsub.s32 %v486, %v488
        %v490 = vrot.slane %v476, %v489
        %v491 = vcombine.low %v436, %v442
        %v492 = vcombine.high %v436, %v442
        %v494 = vunpack.c.l.s4 1983009808
        %v495 = vunpack.c.0.s8 %v494
        %v496 = vlaneseq
        %v497 = vshrl.u32 %v496, 7
        %v498 = vsub.s32 %v495, %v497
        %v499 = vrot.slane %v491, %v498
        %v501 = vunpack.c.l.s4 1983009808
        %v502 = vunpack.c.0.s8 %v501
        %v503 = vlaneseq
        %v504 = vshrl.u32 %v503, 7
        %v505 = vsub.s32 %v502, %v504
        %v506 = vrot.slane %v492, %v505
        %v507 = vcombine.low %v439, %v445
        %v508 = vcombine.high %v439, %v445
        %v510 = vunpack.c.l.s4 1983009808
        %v511 = vunpack.c.0.s8 %v510
        %v512 = vlaneseq
        %v513 = vshrl.u32 %v512, 7
        %v514 = vsub.s32 %v511, %v513
        %v515 = vrot.slane %v507, %v514
        %v517 = vunpack.c.l.s4 1983009808
        %v518 = vunpack.c.0.s8 %v517
        %v519 = vlaneseq
        %v520 = vshrl.u32 %v519, 7
        %v521 = vsub.s32 %v518, %v520
        %v522 = vrot.slane %v508, %v521
        %v523 = vcombine.low %v467, %v483
        %v524 = vcombine.high %v467, %v483
        %v526 = vunpack.c.l.s4 1934713408
        %v527 = vunpack.c.0.s8 %v526
        %v528 = vlaneseq
        %v529 = vshrl.u32 %v528, 7
        %v530 = vsub.s32 %v527, %v529
        %v531 = vrot.slane %v523, %v530
        %v533 = vunpack.c.l.s4 1934713408
        %v534 = vunpack.c.0.s8 %v533
        %v535 = vlaneseq
        %v536 = vshrl.u32 %v535, 7
        %v537 = vsub.s32 %v534, %v536
        %v538 = vrot.slane %v524, %v537
        %v539 = vcombine.low %v474, %v490
        %v540 = vcombine.high %v474, %v490
        %v542 = vunpack.c.l.s4 1934713408
        %v543 = vunpack.c.0.s8 %v542
        %v544 = vlaneseq
        %v545 = vshrl.u32 %v544, 7
        %v546 = vsub.s32 %v543, %v545
        %v547 = vrot.slane %v539, %v546
        %v549 = vunpack.c.l.s4 1934713408
        %v550 = vunpack.c.0.s8 %v549
        %v551 = vlaneseq
        %v552 = vshrl.u32 %v551, 7
        %v553 = vsub.s32 %v550, %v552
        %v554 = vrot.slane %v540, %v553
        %v555 = vcombine.low %v499, %v515
        %v556 = vcombine.high %v499, %v515
        %v558 = vunpack.c.l.s4 1934713408
        %v559 = vunpack.c.0.s8 %v558
        %v560 = vlaneseq
        %v561 = vshrl.u32 %v560, 7
        %v562 = vsub.s32 %v559, %v561
        %v563 = vrot.slane %v555, %v562
        %v565 = vunpack.c.l.s4 1934713408
        %v566 = vunpack.c.0.s8 %v565
        %v567 = vlaneseq
        %v568 = vshrl.u32 %v567, 7
        %v569 = vsub.s32 %v566, %v568
        %v570 = vrot.slane %v556, %v569
        %v571 = vcombine.low %v506, %v522
        %v572 = vcombine.high %v506, %v522
        %v574 = vunpack.c.l.s4 1934713408
        %v575 = vunpack.c.0.s8 %v574
        %v576 = vlaneseq
        %v577 = vshrl.u32 %v576, 7
        %v578 = vsub.s32 %v575, %v577
        %v579 = vrot.slane %v571, %v578
        %v581 = vunpack.c.l.s4 1934713408
        %v582 = vunpack.c.0.s8 %v581
        %v583 = vlaneseq
        %v584 = vshrl.u32 %v583, 7
        %v585 = vsub.s32 %v582, %v584
        %v586 = vrot.slane %v572, %v585
        %v587 = vcombine.low %v531, %v563
        %v588 = vcombine.high %v531, %v563
        %v589 = vcombine.low %v538, %v570
        %v590 = vcombine.high %v538, %v570
        %v591 = vcombine.low %v547, %v579
        %v592 = vcombine.high %v547, %v579
        %v593 = vcombine.low %v554, %v586
        %v594 = vcombine.high %v554, %v586
        %v595 = vcombine.low %v448, %v454
        %v596 = vcombine.high %v448, %v454
        %v598 = vunpack.c.l.s4 1983009808
        %v599 = vunpack.c.0.s8 %v598
        %v600 = vlaneseq
        %v601 = vshrl.u32 %v600, 7
        %v602 = vsub.s32 %v599, %v601
        %v603 = vrot.slane %v595, %v602
        %v605 = vunpack.c.l.s4 1983009808
        %v606 = vunpack.c.0.s8 %v605
        %v607 = vlaneseq
        %v608 = vshrl.u32 %v607, 7
        %v609 = vsub.s32 %v606, %v608
        %v610 = vrot.slane %v596, %v609
        %v611 = vcombine.low %v451, %v457
        %v612 = vcombine.high %v451, %v457
        %v614 = vunpack.c.l.s4 1983009808
        %v615 = vunpack.c.0.s8 %v614
        %v616 = vlaneseq
        %v617 = vshrl.u32 %v616, 7
        %v618 = vsub.s32 %v615, %v617
        %v619 = vrot.slane %v611, %v618
        %v621 = vunpack.c.l.s4 1983009808
        %v622 = vunpack.c.0.s8 %v621
        %v623 = vlaneseq
        %v624 = vshrl.u32 %v623, 7
        %v625 = vsub.s32 %v622, %v624
        %v626 = vrot.slane %v612, %v625
        %v627 = vcombine.low %v603, %v619
        %v628 = vcombine.high %v603, %v619
        %v630 = vunpack.c.l.s4 1934713408
        %v631 = vunpack.c.0.s8 %v630
        %v632 = vlaneseq
        %v633 = vshrl.u32 %v632, 7
        %v634 = vsub.s32 %v631, %v633
        %v635 = vrot.slane %v627, %v634
        %v637 = vunpack.c.l.s4 1934713408
        %v638 = vunpack.c.0.s8 %v637
        %v639 = vlaneseq
        %v640 = vshrl.u32 %v639, 7
        %v641 = vsub.s32 %v638, %v640
        %v642 = vrot.slane %v628, %v641
        %v643 = vcombine.low %v610, %v626
        %v644 = vcombine.high %v610, %v626
        %v646 = vunpack.c.l.s4 1934713408
        %v647 = vunpack.c.0.s8 %v646
        %v648 = vlaneseq
        %v649 = vshrl.u32 %v648, 7
        %v650 = vsub.s32 %v647, %v649
        %v651 = vrot.slane %v643, %v650
        %v653 = vunpack.c.l.s4 1934713408
        %v654 = vunpack.c.0.s8 %v653
        %v655 = vlaneseq
        %v656 = vshrl.u32 %v655, 7
        %v657 = vsub.s32 %v654, %v656
        %v658 = vrot.slane %v644, %v657
        %v659 = vcombine.high %v635, 0.0
        %v660 = vcombine.high %v642, 0.0
        %v661 = vcombine.high %v651, 0.0
        %v662 = vcombine.high %v658, 0.0
        %v663 = vcombine.low %v587, %v589
        %v664 = vcombine.high %v587, %v589
        %v666 = vunpack.c.l.s4 1983009808
        %v667 = vunpack.c.0.s8 %v666
        %v668 = vlaneseq
        %v669 = vshrl.u32 %v668, 7
        %v670 = vsub.s32 %v667, %v669
        %v671 = vrot.slane %v663, %v670
        %v673 = vunpack.c.l.s4 1983009808
        %v674 = vunpack.c.0.s8 %v673
        %v675 = vlaneseq
        %v676 = vshrl.u32 %v675, 7
        %v677 = vsub.s32 %v674, %v676
        %v678 = vrot.slane %v664, %v677
        %v679 = vcombine.low %v588, %v590
        %v680 = vcombine.high %v588, %v590
        %v682 = vunpack.c.l.s4 1983009808
        %v683 = vunpack.c.0.s8 %v682
        %v684 = vlaneseq
        %v685 = vshrl.u32 %v684, 7
        %v686 = vsub.s32 %v683, %v685
        %v687 = vrot.slane %v679, %v686
        %v689 = vunpack.c.l.s4 1983009808
        %v690 = vunpack.c.0.s8 %v689
        %v691 = vlaneseq
        %v692 = vshrl.u32 %v691, 7
        %v693 = vsub.s32 %v690, %v692
        %v694 = vrot.slane %v680, %v693
        %v695 = vcombine.low %v591, %v593
        %v696 = vcombine.high %v591, %v593
        %v698 = vunpack.c.l.s4 1983009808
        %v699 = vunpack.c.0.s8 %v698
        %v700 = vlaneseq
        %v701 = vshrl.u32 %v700, 7
        %v702 = vsub.s32 %v699, %v701
        %v703 = vrot.slane %v695, %v702
        %v705 = vunpack.c.l.s4 1983009808
        %v706 = vunpack.c.0.s8 %v705
        %v707 = vlaneseq
        %v708 = vshrl.u32 %v707, 7
        %v709 = vsub.s32 %v706, %v708
        %v710 = vrot.slane %v696, %v709
        %v711 = vcombine.low %v592, %v594
        %v712 = vcombine.high %v592, %v594
        %v714 = vunpack.c.l.s4 1983009808
        %v715 = vunpack.c.0.s8 %v714
        %v716 = vlaneseq
        %v717 = vshrl.u32 %v716, 7
        %v718 = vsub.s32 %v715, %v717
        %v719 = vrot.slane %v711, %v718
        %v721 = vunpack.c.l.s4 1983009808
        %v722 = vunpack.c.0.s8 %v721
        %v723 = vlaneseq
        %v724 = vshrl.u32 %v723, 7
        %v725 = vsub.s32 %v722, %v724
        %v726 = vrot.slane %v712, %v725
        %v727 = vcombine.low %v671, %v687
        %v728 = vcombine.high %v671, %v687
        %v730 = vunpack.c.l.s4 1934713408
        %v731 = vunpack.c.0.s8 %v730
        %v732 = vlaneseq
        %v733 = vshrl.u32 %v732, 7
        %v734 = vsub.s32 %v731, %v733
        %v735 = vrot.slane %v727, %v734
        %v737 = vunpack.c.l.s4 1934713408
        %v738 = vunpack.c.0.s8 %v737
        %v739 = vlaneseq
        %v740 = vshrl.u32 %v739, 7
        %v741 = vsub.s32 %v738, %v740
        %v742 = vrot.slane %v728, %v741
        %v743 = vcombine.low %v678, %v694
        %v744 = vcombine.high %v678, %v694
        %v746 = vunpack.c.l.s4 1934713408
        %v747 = vunpack.c.0.s8 %v746
        %v748 = vlaneseq
        %v749 = vshrl.u32 %v748, 7
        %v750 = vsub.s32 %v747, %v749
        %v751 = vrot.slane %v743, %v750
        %v753 = vunpack.c.l.s4 1934713408
        %v754 = vunpack.c.0.s8 %v753
        %v755 = vlaneseq
        %v756 = vshrl.u32 %v755, 7
        %v757 = vsub.s32 %v754, %v756
        %v758 = vrot.slane %v744, %v757
        %v759 = vcombine.low %v703, %v719
        %v760 = vcombine.high %v703, %v719
        %v762 = vunpack.c.l.s4 1934713408
        %v763 = vunpack.c.0.s8 %v762
        %v764 = vlaneseq
        %v765 = vshrl.u32 %v764, 7
        %v766 = vsub.s32 %v763, %v765
        %v767 = vrot.slane %v759, %v766
        %v769 = vunpack.c.l.s4 1934713408
        %v770 = vunpack.c.0.s8 %v769
        %v771 = vlaneseq
        %v772 = vshrl.u32 %v771, 7
        %v773 = vsub.s32 %v770, %v772
        %v774 = vrot.slane %v760, %v773
        %v775 = vcombine.low %v710, %v726
        %v776 = vcombine.high %v710, %v726
        %v778 = vunpack.c.l.s4 1934713408
        %v779 = vunpack.c.0.s8 %v778
        %v780 = vlaneseq
        %v781 = vshrl.u32 %v780, 7
        %v782 = vsub.s32 %v779, %v781
        %v783 = vrot.slane %v775, %v782
        %v785 = vunpack.c.l.s4 1934713408
        %v786 = vunpack.c.0.s8 %v785
        %v787 = vlaneseq
        %v788 = vshrl.u32 %v787, 7
        %v789 = vsub.s32 %v786, %v788
        %v790 = vrot.slane %v776, %v789
        %v791 = vcombine.low %v735, %v767
        %v792 = vcombine.high %v735, %v767
        %v793 = vcombine.low %v742, %v774
        %v794 = vcombine.high %v742, %v774
        %v795 = vcombine.low %v751, %v783
        %v796 = vcombine.high %v751, %v783
        %v797 = vcombine.low %v758, %v790
        %v798 = vcombine.high %v758, %v790
        %v799 = vcombine.low %v635, %v642
        %v801 = vunpack.c.l.s4 1983009808
        %v802 = vunpack.c.0.s8 %v801
        %v803 = vlaneseq
        %v804 = vshrl.u32 %v803, 7
        %v805 = vsub.s32 %v802, %v804
        %v806 = vrot.slane %v799, %v805
        %v807 = vcombine.low %v659, %v660
        %v809 = vunpack.c.l.s4 1983009808
        %v810 = vunpack.c.0.s8 %v809
        %v811 = vlaneseq
        %v812 = vshrl.u32 %v811, 7
        %v813 = vsub.s32 %v810, %v812
        %v814 = vrot.slane %v807, %v813
        %v815 = vcombine.low %v651, %v658
        %v817 = vunpack.c.l.s4 1983009808
        %v818 = vunpack.c.0.s8 %v817
        %v819 = vlaneseq
        %v820 = vshrl.u32 %v819, 7
        %v821 = vsub.s32 %v818, %v820
        %v822 = vrot.slane %v815, %v821
        %v823 = vcombine.low %v661, %v662
        %v825 = vunpack.c.l.s4 1983009808
        %v826 = vunpack.c.0.s8 %v825
        %v827 = vlaneseq
        %v828 = vshrl.u32 %v827, 7
        %v829 = vsub.s32 %v826, %v828
        %v830 = vrot.slane %v823, %v829
        %v831 = vcombine.low %v806, %v814
        %v832 = vcombine.high %v806, %v814
        %v834 = vunpack.c.l.s4 1934713408
        %v835 = vunpack.c.0.s8 %v834
        %v836 = vlaneseq
        %v837 = vshrl.u32 %v836, 7
        %v838 = vsub.s32 %v835, %v837
        %v839 = vrot.slane %v831, %v838
        %v841 = vunpack.c.l.s4 1934713408
        %v842 = vunpack.c.0.s8 %v841
        %v843 = vlaneseq
        %v844 = vshrl.u32 %v843, 7
        %v845 = vsub.s32 %v842, %v844
        %v846 = vrot.slane %v832, %v845
        %v847 = vcombine.low %v822, %v830
        %v848 = vcombine.high %v822, %v830
        %v850 = vunpack.c.l.s4 1934713408
        %v851 = vunpack.c.0.s8 %v850
        %v852 = vlaneseq
        %v853 = vshrl.u32 %v852, 7
        %v854 = vsub.s32 %v851, %v853
        %v855 = vrot.slane %v847, %v854
        %v857 = vunpack.c.l.s4 1934713408
        %v858 = vunpack.c.0.s8 %v857
        %v859 = vlaneseq
        %v860 = vshrl.u32 %v859, 7
        %v861 = vsub.s32 %v858, %v860
        %v862 = vrot.slane %v848, %v861
        %v863 = vcombine.low %v839, %v855
        %v864 = vcombine.high %v839, %v855
        %v865 = vcombine.low %v846, %v862
        %v866 = vcombine.high %v846, %v862
        %vm867 = vcmask 64512
        %868 = vst.msk [vmem:[%s308] sm:$0xff] %vm867, %v791
        %869 = vst.msk [vmem:[%s308 + $0x8] sm:$0xff] %vm867, %v792
        %870 = vst.msk [vmem:[%s308 + $0x10] sm:$0xff] %vm867, %v793
        %871 = vst.msk [vmem:[%s308 + $0x18] sm:$0xff] %vm867, %v794
        %872 = vst.msk [vmem:[%s308 + $0x20] sm:$0xff] %vm867, %v795
        %873 = vst.msk [vmem:[%s308 + $0x28] sm:$0xff] %vm867, %v796
        %874 = vst.msk [vmem:[%s308 + $0x30] sm:$0xff] %vm867, %v797
        %875 = vst.msk [vmem:[%s308 + $0x38] sm:$0xff] %vm867, %v798
        %876 = vst.msk [vmem:[%s308 + $0x40] sm:$0xff] %vm867, %v863
        %877 = vst.msk [vmem:[%s308 + $0x48] sm:$0xff] %vm867, %v864
        %878 = vst.msk [vmem:[%s308 + $0x50] sm:$0xff] %vm867, %v865
        %879 = vst.msk [vmem:[%s308 + $0x58] sm:$0xff] %vm867, %v866
        %s880 = sand.u32 %s158, 1
        %s881 = scalar_lea.sflag [#allocation4], %s880
        %s882 = sand.u32 %s158, 1
        %s883 = smul.addr %s882, 96
        %s884 = scalar_lea.vmem [#allocation11], %s883
        // Predicated region
        $region61: #{tpu_custom_call.1} parent=39 // pred_check
          %p885 = pneg %p168
        $region62: #{tpu_custom_call.1} parent=39 // pred_check_branch
          %887 = sbr.rel (%p885) target = $region64
        $region63: #{tpu_custom_call.1} parent=39 // pred_region
          %s889 = ssub.s32 1536, 1536
          %890 = vsyncadd %s881, %s889
          %s891 = smul.addr %s28, 12
          %s892 = sadd.s32 %s29, %s891
          %s893 = smul.addr %s892, 128
          %s894 = scalar_lea.hbm %s5, %s893
          %s895 = sshll.u32 %s884, 4
          %s896 = int_to_ptr.vmem [resolvable:$true] %s895
          %901 = dma.vmem_to_hbm [thread:$0]  %s896, 1536, %s894, %s881, 128, 128, 8
        $region64: #{tpu_custom_call.1} parent=39 // pred_fallthru
          _
      $region40: #{tpu_custom_call.1} parent=5 // pred_fallthru
        _
      %p902 = scmp.le.s32.totalorder 2, %s19
      // Predicated region
      $region65: #{tpu_custom_call.1} parent=5 // pred_check
        %p903 = pneg %p902
      $region66: #{tpu_custom_call.1} parent=5 // pred_check_branch
        %905 = sbr.rel (%p903) target = $region68
      $region67: #{tpu_custom_call.1} parent=5 // pred_region
        %s906 = ssub.s32 %s19, 2
        // Predicated region
        $region69: #{tpu_custom_call.1} parent=67 // pred_check
          %p907 = pneg %p174
        $region70: #{tpu_custom_call.1} parent=67 // pred_check_branch
          %909 = sbr.rel (%p907) target = $region72
        $region71: #{tpu_custom_call.1} parent=67 // pred_region
          %s910 = sand.u32 %s159, 1
          %s911 = scalar_lea.sflag [#allocation4], %s910
          %s912 = sand.u32 %s159, 1
          %s913 = smul.addr %s912, 96
          %s914 = scalar_lea.vmem [#allocation11], %s913
          %915 = dma.done %s911, 1536
        $region72: #{tpu_custom_call.1} parent=67 // pred_fallthru
          _
      $region68: #{tpu_custom_call.1} parent=5 // pred_fallthru
        _
    $region6: #{tpu_custom_call.1} parent=1 // loop_footer
      %s23 = sadd.s32 1, %s19
    $region7: #{tpu_custom_call.1} parent=1 // loop_footer_branch
      %18 = sbr.rel target = $region3
    $region8: #{tpu_custom_call.1} parent=1 // loop_exit
      _
    %916 = vsyncpa [#allocation3], 1
    %s917 = scalar_lea.sflag [#allocation3], 1
    %918 = vsyncpa %s917, 1
    %919 = vsyncpa [#allocation6], 1
    %920 = vsyncpa [#allocation9], 1
    %921 = vsyncpa [#allocation4], 1
    %s922 = scalar_lea.sflag [#allocation4], 1
    %923 = vsyncpa %s922, 1

// kernel: tpu_custom_call.1
$region0: #{tpu_custom_call.1}
  #allocation0 [shape = 'u32[]', space=smem, size = 0x4, offset = 0x4, fixed_abs, tag = 'smem constant byte address 0x4 - core index']
  #allocation1 [shape = 'u32[144,128]{1,0:T(1,128)}', space=vmem, size = 0x12000, scoped, tag = 'internal scratch']
  %s0 = inlined_call_operand.hbm [shape: f32[2,8,32], index: 0, kind: input, shape index: {}]
  %s1 = inlined_call_operand.hbm [shape: f32[1,32], index: 1, kind: input, shape index: {}]
  %s2 = inlined_call_operand.hbm [shape: f32[1,32], index: 2, kind: input, shape index: {}]
  %s3 = inlined_call_operand.hbm [shape: f32[32,96], index: 3, kind: input, shape index: {}]
  %s4 = inlined_call_operand.hbm [shape: f32[1,96], index: 4, kind: input, shape index: {}]
  %s5 = inlined_call_operand.hbm [shape: f32[2,12,8,8], index: 5, kind: output, shape index: {}]
  %s6 = sld [smem:[#allocation0]]
  $region73: #{tpu_custom_call.1} parent=0
    _
  %s8 = ssub.s32 1, %s6
  %s9 = scalar_select 0, %s8, %s6
  $region1: #{tpu_custom_call.1} parent=0
    #allocation2 [shape = 'u8[8192]{0}', space=vmem, size = 0x2000, scoped, tag = 'input window, operand 0']
    #allocation3 [shape = 's32[2]{0}', space=sflag, size = 0x8, scoped, tag = 'scoped memory for tpu_custom_call.1']
    #allocation4 [shape = 's32[2]{0}', space=sflag, size = 0x8, scoped, tag = 'scoped memory for tpu_custom_call.1']
    #allocation5 [shape = 'u8[512]{0}', space=vmem, size = 0x400, scoped, tag = 'input window, operand 1, single buffered']
    #allocation6 [shape = 's32[1]{0}', space=sflag, size = 0x4, scoped, tag = 'scoped memory for tpu_custom_call.1']
    #allocation7 [shape = 'u8[512]{0}', space=vmem, size = 0x400, scoped, tag = 'input window, operand 2, single buffered']
    #allocation8 [shape = 'u8[16384]{0}', space=vmem, size = 0x4000, scoped, tag = 'input window, operand 3, single buffered']
    #allocation9 [shape = 's32[1]{0}', space=sflag, size = 0x4, scoped, tag = 'scoped memory for tpu_custom_call.1']
    #allocation10 [shape = 'u8[512]{0}', space=vmem, size = 0x400, scoped, tag = 'input window, operand 4, single buffered']
    #allocation11 [shape = 'u8[98304]{0}', space=vmem, size = 0x18000, scoped, tag = 'output window, operand 0']
    %10 = vsyncpa [#allocation3], 0
    %s11 = scalar_lea.sflag [#allocation3], 1
    %12 = vsyncpa %s11, 0
    %13 = vsyncpa [#allocation6], 0
    %14 = vsyncpa [#allocation9], 0
    %15 = vsyncpa [#allocation4], 0
    %s16 = scalar_lea.sflag [#allocation4], 1
    %17 = vsyncpa %s16, 0
    loop: start=0, step=1, limit=4
    $region2: #{tpu_custom_call.1} parent=1 // loop_pre_header
      _
    $region3: #{tpu_custom_call.1} parent=1 // loop_header
      %s19 = sphi 0, %s23
      %p20 = scmp.ge.s32.totalorder %s19, 4
      %s26 = sphi 0, %s38
      %s27 = sphi 0, %s34
      %s28 = sphi 0, %s26
      %s29 = sphi 0, %s27
      %s30 = sphi 0, %s28
      %s31 = sphi 0, %s29
      %s43 = sphi 0, %s45
      %s46 = sphi 0, %s43
      %s47 = sphi 0, %s46
      %s63 = sphi 0, %s47
      %s67 = sphi 0, %s67
      %s69 = sphi 0, %s67
      %s70 = sphi 0, %s69
      %s84 = sphi 0, %s70
      %s88 = sphi 0, %s88
      %s90 = sphi 0, %s88
      %s91 = sphi 0, %s90
      %s105 = sphi 0, %s91
      %s109 = sphi 0, %s109
      %s111 = sphi 0, %s109
      %s112 = sphi 0, %s111
      %s126 = sphi 0, %s112
      %s130 = sphi 0, %s130
      %s132 = sphi 0, %s130
      %s133 = sphi 0, %s132
      %s147 = sphi 0, %s133
      %s155 = sphi 0, %s157
      %s158 = sphi 0, %s155
      %s159 = sphi 0, %s158
      %s175 = sphi 0, %s159
    $region4: #{tpu_custom_call.1} parent=1 // loop_header_branch
      %22 = sbr.rel (%p20) target = $region8
    $region5: #{tpu_custom_call.1} parent=1 // loop_body
      %s24 = ssub.s32 %s19, 1
      %s25 = ssub.s32 %s19, 2
      %s32 = sadd.s32 1, %s27
      %p33 = scmp.ge.s32.totalorder %s32, 1
      %s34 = scalar_select %p33, 0, %s32
      %s35 = sadd.s32 1, %s26
      %s36 = scalar_select %p33, %s35, %s26
      %p37 = scmp.ge.s32.totalorder %s36, 2
      %s38 = scalar_select %p37, 0, %s36
      %s39 = ssub.s32 %s26, %s38
      %s40 = ssub.s32 %s27, %s34
      %s41 = sor.u32 %s39, %s40
      %p42 = scmp.eq.s32.totalorder %s41, 0
      %s44 = sadd.s32 %s43, 1
      %s45 = scalar_select %p42, %s43, %s44
      %p48 = pneg %p42
      %p49 = scmp.eq.s32.totalorder %s19, 1
      %p50 = por %p48, %p49
      %p51 = scmp.ne.s32.totalorder %s43, %s46
      %p52 = scmp.eq.s32.totalorder %s19, 0
      %p53 = por %p51, %p52
      %p54 = scmp.ne.s32.totalorder %s43, %s46
      %p55 = scmp.eq.s32.totalorder %s24, 1
      %p56 = por %p54, %p55
      %p57 = scmp.ne.s32.totalorder %s46, %s47
      %p58 = scmp.eq.s32.totalorder %s24, 0
      %p59 = por %p57, %p58
      %p60 = scmp.ne.s32.totalorder %s46, %s47
      %p61 = scmp.eq.s32.totalorder %s25, 1
      %p62 = por %p60, %p61
      %p64 = scmp.ne.s32.totalorder %s47, %s63
      %p65 = scmp.eq.s32.totalorder %s25, 0
      %p66 = por %p64, %p65
      %s68 = sadd.s32 %s67, 1
      %p71 = scmp.eq.s32.totalorder %s19, 1
      %p72 = scmp.ne.s32.totalorder %s67, %s69
      %p73 = scmp.eq.s32.totalorder %s19, 0
      %p74 = por %p72, %p73
      %p75 = scmp.ne.s32.totalorder %s67, %s69
      %p76 = scmp.eq.s32.totalorder %s24, 1
      %p77 = por %p75, %p76
      %p78 = scmp.ne.s32.totalorder %s69, %s70
      %p79 = scmp.eq.s32.totalorder %s24, 0
      %p80 = por %p78, %p79
      %p81 = scmp.ne.s32.totalorder %s69, %s70
      %p82 = scmp.eq.s32.totalorder %s25, 1
      %p83 = por %p81, %p82
      %p85 = scmp.ne.s32.totalorder %s70, %s84
      %p86 = scmp.eq.s32.totalorder %s25, 0
      %p87 = por %p85, %p86
      %s89 = sadd.s32 %s88, 1
      %p92 = scmp.eq.s32.totalorder %s19, 1
      %p93 = scmp.ne.s32.totalorder %s88, %s90
      %p94 = scmp.eq.s32.totalorder %s19, 0
      %p95 = por %p93, %p94
      %p96 = scmp.ne.s32.totalorder %s88, %s90
      %p97 = scmp.eq.s32.totalorder %s24, 1
      %p98 = por %p96, %p97
      %p99 = scmp.ne.s32.totalorder %s90, %s91
      %p100 = scmp.eq.s32.totalorder %s24, 0
      %p101 = por %p99, %p100
      %p102 = scmp.ne.s32.totalorder %s90, %s91
      %p103 = scmp.eq.s32.totalorder %s25, 1
      %p104 = por %p102, %p103
      %p106 = scmp.ne.s32.totalorder %s91, %s105
      %p107 = scmp.eq.s32.totalorder %s25, 0
      %p108 = por %p106, %p107
      %s110 = sadd.s32 %s109, 1
      %p113 = scmp.eq.s32.totalorder %s19, 1
      %p114 = scmp.ne.s32.totalorder %s109, %s111
      %p115 = scmp.eq.s32.totalorder %s19, 0
      %p116 = por %p114, %p115
      %p117 = scmp.ne.s32.totalorder %s109, %s111
      %p118 = scmp.eq.s32.totalorder %s24, 1
      %p119 = por %p117, %p118
      %p120 = scmp.ne.s32.totalorder %s111, %s112
      %p121 = scmp.eq.s32.totalorder %s24, 0
      %p122 = por %p120, %p121
      %p123 = scmp.ne.s32.totalorder %s111, %s112
      %p124 = scmp.eq.s32.totalorder %s25, 1
      %p125 = por %p123, %p124
      %p127 = scmp.ne.s32.totalorder %s112, %s126
      %p128 = scmp.eq.s32.totalorder %s25, 0
      %p129 = por %p127, %p128
      %s131 = sadd.s32 %s130, 1
      %p134 = scmp.eq.s32.totalorder %s19, 1
      %p135 = scmp.ne.s32.totalorder %s130, %s132
      %p136 = scmp.eq.s32.totalorder %s19, 0
      %p137 = por %p135, %p136
      %p138 = scmp.ne.s32.totalorder %s130, %s132
      %p139 = scmp.eq.s32.totalorder %s24, 1
      %p140 = por %p138, %p139
      %p141 = scmp.ne.s32.totalorder %s132, %s133
      %p142 = scmp.eq.s32.totalorder %s24, 0
      %p143 = por %p141, %p142
      %p144 = scmp.ne.s32.totalorder %s132, %s133
      %p145 = scmp.eq.s32.totalorder %s25, 1
      %p146 = por %p144, %p145
      %p148 = scmp.ne.s32.totalorder %s133, %s147
      %p149 = scmp.eq.s32.totalorder %s25, 0
      %p150 = por %p148, %p149
      %s151 = ssub.s32 %s26, %s38
      %s152 = ssub.s32 %s27, %s34
      %s153 = sor.u32 %s151, %s152
      %p154 = scmp.eq.s32.totalorder %s153, 0
      %s156 = sadd.s32 %s155, 1
      %s157 = scalar_select %p154, %s155, %s156
      %p160 = pneg %p154
      %p161 = scmp.eq.s32.totalorder %s19, 1
      %p162 = por %p160, %p161
      %p163 = scmp.ne.s32.totalorder %s155, %s158
      %p164 = scmp.eq.s32.totalorder %s19, 0
      %p165 = por %p163, %p164
      %p166 = scmp.ne.s32.totalorder %s155, %s158
      %p167 = scmp.eq.s32.totalorder %s24, 1
      %p168 = por %p166, %p167
      %p169 = scmp.ne.s32.totalorder %s158, %s159
      %p170 = scmp.eq.s32.totalorder %s24, 0
      %p171 = por %p169, %p170
      %p172 = scmp.ne.s32.totalorder %s158, %s159
      %p173 = scmp.eq.s32.totalorder %s25, 1
      %p174 = por %p172, %p173
      %p176 = scmp.ne.s32.totalorder %s159, %s175
      %p177 = scmp.eq.s32.totalorder %s25, 0
      %p178 = por %p176, %p177
      %p179 = scmp.le.s32.totalorder 1, %s19
      %p180 = scmp.lt.s32.totalorder %s19, 3
      %p181 = pnand %p179, %p180
      %p182 = pneg %p181
      // Predicated region
      $region9: #{tpu_custom_call.1} parent=5 // pred_check
        _
      $region10: #{tpu_custom_call.1} parent=5 // pred_check_branch
        %184 = sbr.rel (%p181) target = $region12
      $region11: #{tpu_custom_call.1} parent=5 // pred_region
        %s185 = ssub.s32 %s19, 1
        // Predicated region
        $region13: #{tpu_custom_call.1} parent=11 // pred_check
          %p186 = pneg %p80
        $region14: #{tpu_custom_call.1} parent=11 // pred_check_branch
          %188 = sbr.rel (%p186) target = $region16
        $region15: #{tpu_custom_call.1} parent=11 // pred_region
          %s190 = ssub.s32 16, 16
          %191 = vsyncadd [#allocation6], %s190
          %s193 = sshll.u32 [#allocation5], 4
          %s194 = int_to_ptr.vmem [resolvable:$true] %s193
          %196 = dma.hbm_to_vmem [thread:$0]  %s1, 16, %s194, [#allocation6]
        $region16: #{tpu_custom_call.1} parent=11 // pred_fallthru
          _
        // Predicated region
        $region17: #{tpu_custom_call.1} parent=11 // pred_check
          %p197 = pneg %p101
        $region18: #{tpu_custom_call.1} parent=11 // pred_check_branch
          %199 = sbr.rel (%p197) target = $region20
        $region19: #{tpu_custom_call.1} parent=11 // pred_region
          %s201 = ssub.s32 16, 16
          %202 = vsyncadd [#allocation6], %s201
          %s204 = sshll.u32 [#allocation7], 4
          %s205 = int_to_ptr.vmem [resolvable:$true] %s204
          %207 = dma.hbm_to_vmem [thread:$0]  %s2, 16, %s205, [#allocation6]
        $region20: #{tpu_custom_call.1} parent=11 // pred_fallthru
          _
        // Predicated region
        $region21: #{tpu_custom_call.1} parent=11 // pred_check
          %p208 = pneg %p122
        $region22: #{tpu_custom_call.1} parent=11 // pred_check_branch
          %210 = sbr.rel (%p208) target = $region24
        $region23: #{tpu_custom_call.1} parent=11 // pred_region
          %s212 = ssub.s32 512, 512
          %213 = vsyncadd [#allocation9], %s212
          %s214 = sshll.u32 [#allocation8], 4
          %s215 = int_to_ptr.vmem [resolvable:$true] %s214
          %220 = dma.hbm_to_vmem [thread:$0]  %s3, 512, %s215, [#allocation9], 128, 128, 8
        $region24: #{tpu_custom_call.1} parent=11 // pred_fallthru
          _
        // Predicated region
        $region25: #{tpu_custom_call.1} parent=11 // pred_check
          %p221 = pneg %p143
        $region26: #{tpu_custom_call.1} parent=11 // pred_check_branch
          %223 = sbr.rel (%p221) target = $region28
        $region27: #{tpu_custom_call.1} parent=11 // pred_region
          %s225 = ssub.s32 16, 16
          %226 = vsyncadd [#allocation9], %s225
          %s228 = sshll.u32 [#allocation10], 4
          %s229 = int_to_ptr.vmem [resolvable:$true] %s228
          %231 = dma.hbm_to_vmem [thread:$0]  %s4, 16, %s229, [#allocation9]
        $region28: #{tpu_custom_call.1} parent=11 // pred_fallthru
          _
      $region12: #{tpu_custom_call.1} parent=5 // pred_fallthru
        _
      %p232 = scmp.lt.s32.totalorder %s19, 2
      // Predicated region
      $region29: #{tpu_custom_call.1} parent=5 // pred_check
        %p233 = pneg %p232
      $region30: #{tpu_custom_call.1} parent=5 // pred_check_branch
        %235 = sbr.rel (%p233) target = $region32
      $region31: #{tpu_custom_call.1} parent=5 // pred_region
        // Predicated region
        $region33: #{tpu_custom_call.1} parent=31 // pred_check
          %p236 = pneg %p53
        $region34: #{tpu_custom_call.1} parent=31 // pred_check_branch
          %238 = sbr.rel (%p236) target = $region36
        $region35: #{tpu_custom_call.1} parent=31 // pred_region
          %s239 = sand.u32 %s43, 1
          %s240 = scalar_lea.sflag [#allocation3], %s239
          %s241 = sand.u32 %s43, 1
          %s242 = smul.addr %s241, 8
          %s243 = scalar_lea.vmem [#allocation2], %s242
          %s245 = ssub.s32 128, 128
          %246 = vsyncadd %s240, %s245
          %s247 = sadd.s32 %s27, %s26
          %s248 = smul.addr %s247, 128
          %s249 = scalar_lea.hbm %s0, %s248
          %s251 = sshll.u32 %s243, 4
          %s252 = int_to_ptr.vmem [resolvable:$true] %s251
          %254 = dma.hbm_to_vmem [thread:$0]  %s249, 128, %s252, %s240
        $region36: #{tpu_custom_call.1} parent=31 // pred_fallthru
          _
      $region32: #{tpu_custom_call.1} parent=5 // pred_fallthru
        _
      %p255 = scmp.le.s32.totalorder 1, %s19
      %p256 = scmp.lt.s32.totalorder %s19, 3
      %p257 = pnand %p255, %p256
      %p258 = pneg %p257
      // Predicated region
      $region37: #{tpu_custom_call.1} parent=5 // pred_check
        _
      $region38: #{tpu_custom_call.1} parent=5 // pred_check_branch
        %260 = sbr.rel (%p257) target = $region40
      $region39: #{tpu_custom_call.1} parent=5 // pred_region
        %s261 = ssub.s32 %s19, 1
        %s262 = sand.u32 %s46, 1
        %s263 = scalar_lea.sflag [#allocation3], %s262
        %s264 = sand.u32 %s46, 1
        %s265 = smul.addr %s264, 8
        %s266 = scalar_lea.vmem [#allocation2], %s265
        // Predicated region
        $region41: #{tpu_custom_call.1} parent=39 // pred_check
          %p267 = pneg %p59
        $region42: #{tpu_custom_call.1} parent=39 // pred_check_branch
          %269 = sbr.rel (%p267) target = $region44
        $region43: #{tpu_custom_call.1} parent=39 // pred_region
          %270 = dma.done %s263, 128
        $region44: #{tpu_custom_call.1} parent=39 // pred_fallthru
          _
        // Predicated region
        $region45: #{tpu_custom_call.1} parent=39 // pred_check
          %p271 = pneg %p80
        $region46: #{tpu_custom_call.1} parent=39 // pred_check_branch
          %273 = sbr.rel (%p271) target = $region48
        $region47: #{tpu_custom_call.1} parent=39 // pred_region
          %274 = dma.done [#allocation6], 16
        $region48: #{tpu_custom_call.1} parent=39 // pred_fallthru
          _
        // Predicated region
        $region49: #{tpu_custom_call.1} parent=39 // pred_check
          %p275 = pneg %p101
        $region50: #{tpu_custom_call.1} parent=39 // pred_check_branch
          %277 = sbr.rel (%p275) target = $region52
        $region51: #{tpu_custom_call.1} parent=39 // pred_region
          %278 = dma.done [#allocation6], 16
        $region52: #{tpu_custom_call.1} parent=39 // pred_fallthru
          _
        // Predicated region
        $region53: #{tpu_custom_call.1} parent=39 // pred_check
          %p279 = pneg %p122
        $region54: #{tpu_custom_call.1} parent=39 // pred_check_branch
          %281 = sbr.rel (%p279) target = $region56
        $region55: #{tpu_custom_call.1} parent=39 // pred_region
          %282 = dma.done [#allocation9], 512
        $region56: #{tpu_custom_call.1} parent=39 // pred_fallthru
          _
        // Predicated region
        $region57: #{tpu_custom_call.1} parent=39 // pred_check
          %p283 = pneg %p143
        $region58: #{tpu_custom_call.1} parent=39 // pred_check_branch
          %285 = sbr.rel (%p283) target = $region60
        $region59: #{tpu_custom_call.1} parent=39 // pred_region
          %286 = dma.done [#allocation9], 16
        $region60: #{tpu_custom_call.1} parent=39 // pred_fallthru
          _
        %s287 = sand.u32 %s46, 1
        %s288 = scalar_lea.sflag [#allocation3], %s287
        %s289 = sand.u32 %s46, 1
        %s290 = smul.addr %s289, 8
        %s291 = scalar_lea.vmem [#allocation2], %s290
        %p292 = pneg %p59
        %p293 = pneg %p56
        %p294 = pneg %p80
        %p295 = pneg %p77
        %p296 = pneg %p101
        %p297 = pneg %p98
        %p298 = pneg %p122
        %p299 = pneg %p119
        %p300 = pneg %p143
        %p301 = pneg %p140
        %p302 = pneg %p171
        %p303 = pneg %p168
        %s304 = sand.u32 %s158, 1
        %s305 = scalar_lea.sflag [#allocation4], %s304
        %s306 = sand.u32 %s158, 1
        %s307 = smul.addr %s306, 96
        %s308 = scalar_lea.vmem [#allocation11], %s307
        %v309 = vld [vmem:[%s266] sm:$0xff]
        %v310 = vld [vmem:[#allocation5] sm:$0x1]
        %v311 = vld [vmem:[#allocation7] sm:$0x1]
        %vm312 = vcmask 261120
        %v313 = vsel %vm312, %v309, 0.0
        %314 = vadd.xlane.f32.xlu0 %v313
        %v315 = vpop.xlane.xlu0 %314
        %v316 = vrcp.pop 32.0
        %v317 = vmul.f32 %v315, %v316
        %v318 = vsub.f32 %v309, %v317
        %v319 = vmul.f32 %v318, %v318
        %v320 = vsel %vm312, %v319, 0.0
        %321 = vadd.xlane.f32.xlu0 %v320
        %v322 = vpop.xlane.xlu0 %321
        %v323 = vmul.f32 %v322, %v316
        %v324 = vadd.f32 %v323, 1e-05
        %v325 = vrsqrt.pop %v324
        %v326 = vmul.f32 %v318, %v325
        %v328 = vlaneseq
        %v329 = vshrl.u32 %v328, 7
        %v330 = vsub.s32 0, %v329
        %v331 = vrot.slane %v310, %v330
        %v333 = vmul.f32 %v326, %v331
        %v335 = vlaneseq
        %v336 = vshrl.u32 %v335, 7
        %v337 = vsub.s32 0, %v336
        %v338 = vrot.slane %v311, %v337
        %v340 = vadd.f32 %v333, %v338
        %v341 = vld [vmem:[#allocation8] sm:$0xff]
        %v342 = vld [vmem:[#allocation8 + $0x8] sm:$0xff]
        %v343 = vld [vmem:[#allocation8 + $0x10] sm:$0xff]
        %v344 = vld [vmem:[#allocation8 + $0x18] sm:$0xff]
        %v345 = vld [vmem:[#allocation10] sm:$0x1]
        %v347 = vlaneseq
        %v348 = vshrl.u32 %v347, 7
        %v349 = vsub.s32 0, %v348
        %v350 = vrot.slane %v345, %v349
        %v353 = vsel %vm312, %v340, 0
        %355 = vmatprep.subr.mxu0 0.0
        %356 = vmatpush1.msra.mxu0 %v341
        %357 = vmatprep.subr.mxu0 0.0
        %358 = vmatpush1.msra.mxu0 %v342
        %359 = vmatprep.subr.mxu0 0.0
        %360 = vmatpush1.msra.mxu0 %v343
        %361 = vmatprep.subr.mxu0 0.0
        %362 = vmatpush1.msra.mxu0 %v344
        %363 = vmatprep.subr.mxu0 0.0
        %364 = vmatpush1.msra.mxu0 0.0
        %365 = vmatprep.subr.mxu0 0.0
        %366 = vmatpush1.msra.mxu0 0.0
        %367 = vmatprep.subr.mxu0 0.0
        %368 = vmatpush1.msra.mxu0 0.0
        %369 = vmatprep.subr.mxu0 0.0
        %370 = vmatpush1.msra.mxu0 0.0
        %371 = vmatprep.subr.mxu0 0.0
        %372 = vmatpush1.msra.mxu0 0.0
        %373 = vmatprep.subr.mxu0 0.0
        %374 = vmatpush1.msra.mxu0 0.0
        %375 = vmatprep.subr.mxu0 0.0
        %376 = vmatpush1.msra.mxu0 0.0
        %377 = vmatprep.subr.mxu0 0.0
        %378 = vmatpush1.msra.mxu0 0.0
        %379 = vmatprep.subr.mxu0 0.0
        %380 = vmatpush1.msra.mxu0 0.0
        %381 = vmatprep.subr.mxu0 0.0
        %382 = vmatpush1.msra.mxu0 0.0
        %383 = vmatprep.subr.mxu0 0.0
        %384 = vmatpush1.msra.mxu0 0.0
        %385 = vmatprep.subr.mxu0 0.0
        %386 = vmatpush1.msra.mxu0 0.0
        %387 = vmatprep.subr.mxu0 0.0
        %388 = vmatpush1.msra.mxu0 0.0
        %389 = vmatprep.subr.mxu0 0.0
        %390 = vmatpush1.msra.mxu0 0.0
        %391 = vmatprep.subr.mxu0 0.0
        %392 = vmatpush1.msra.mxu0 0.0
        %393 = vmatprep.subr.mxu0 0.0
        %394 = vmatpush1.msra.mxu0 0.0
        %395 = vmatprep.subr.mxu0 0.0
        %396 = vmatpush1.msra.mxu0 0.0
        %397 = vmatprep.subr.mxu0 0.0
        %398 = vmatpush1.msra.mxu0 0.0
        %399 = vmatprep.subr.mxu0 0.0
        %400 = vmatpush1.msra.mxu0 0.0
        %401 = vmatprep.subr.mxu0 0.0
        %402 = vmatpush1.msra.mxu0 0.0
        %403 = vmatprep.subr.mxu0 0.0
        %404 = vmatpush1.msra.mxu0 0.0
        %405 = vmatprep.subr.mxu0 0.0
        %406 = vmatpush1.msra.mxu0 0.0
        %407 = vmatprep.subr.mxu0 0.0
        %408 = vmatpush1.msra.mxu0 0.0
        %409 = vmatprep.subr.mxu0 0.0
        %410 = vmatpush1.msra.mxu0 0.0
        %411 = vmatprep.subr.mxu0 0.0
        %412 = vmatpush1.msra.mxu0 0.0
        %413 = vmatprep.subr.mxu0 0.0
        %414 = vmatpush1.msra.mxu0 0.0
        %415 = vmatprep.subr.mxu0 0.0
        %416 = vmatpush1.msra.mxu0 0.0
        %417 = vmatprep.subr.mxu0 0.0
        %418 = vmatpush1.msra.mxu0 0.0
        %419 = vmatprep.mubr.f32.mxu0 0.0
        %420 = vmatmul.mubr.f32.gmra.mrb[0].mxu0 %v353
        %v421 = vpop.f32.mrb[0].mxu0
        %v422 = vadd.f32 %v350, %v421
        %v423 = vpop.f32.mrb[0].mxu0
        %424 = vdwg.mxu0
        %426 = vrot.lane.b32.xlu0 %v422, 120
        %v427 = vpop.permute.xlu0 %426
        %429 = vrot.lane.b32.xlu0 %v422, 112
        %v430 = vpop.permute.xlu0 %429
        %432 = vrot.lane.b32.xlu0 %v422, 104
        %v433 = vpop.permute.xlu0 %432
        %435 = vrot.lane.b32.xlu0 %v422, 96
        %v436 = vpop.permute.xlu0 %435
        %438 = vrot.lane.b32.xlu0 %v422, 88
        %v439 = vpop.permute.xlu0 %438
        %441 = vrot.lane.b32.xlu0 %v422, 80
        %v442 = vpop.permute.xlu0 %441
        %444 = vrot.lane.b32.xlu0 %v422, 72
        %v445 = vpop.permute.xlu0 %444
        %447 = vrot.lane.b32.xlu0 %v422, 64
        %v448 = vpop.permute.xlu0 %447
        %450 = vrot.lane.b32.xlu0 %v422, 56
        %v451 = vpop.permute.xlu0 %450
        %453 = vrot.lane.b32.xlu0 %v422, 48
        %v454 = vpop.permute.xlu0 %453
        %456 = vrot.lane.b32.xlu0 %v422, 40
        %v457 = vpop.permute.xlu0 %456
        %v459 = vcombine.low %v422, %v430
        %v460 = vcombine.high %v422, %v430
        %v462 = vunpack.c.l.s4 1983009808
        %v463 = vunpack.c.0.s8 %v462
        %v464 = vlaneseq
        %v465 = vshrl.u32 %v464, 7
        %v466 = vsub.s32 %v463, %v465
        %v467 = vrot.slane %v459, %v466
        %v469 = vunpack.c.l.s4 1983009808
        %v470 = vunpack.c.0.s8 %v469
        %v471 = vlaneseq
        %v472 = vshrl.u32 %v471, 7
        %v473 = vsub.s32 %v470, %v472
        %v474 = vrot.slane %v460, %v473
        %v475 = vcombine.low %v427, %v433
        %v476 = vcombine.high %v427, %v433
        %v478 = vunpack.c.l.s4 1983009808
        %v479 = vunpack.c.0.s8 %v478
        %v480 = vlaneseq
        %v481 = vshrl.u32 %v480, 7
        %v482 = vsub.s32 %v479, %v481
        %v483 = vrot.slane %v475, %v482
        %v485 = vunpack.c.l.s4 1983009808
        %v486 = vunpack.c.0.s8 %v485
        %v487 = vlaneseq
        %v488 = vshrl.u32 %v487, 7
        %v489 = vsub.s32 %v486, %v488
        %v490 = vrot.slane %v476, %v489
        %v491 = vcombine.low %v436, %v442
        %v492 = vcombine.high %v436, %v442
        %v494 = vunpack.c.l.s4 1983009808
        %v495 = vunpack.c.0.s8 %v494
        %v496 = vlaneseq
        %v497 = vshrl.u32 %v496, 7
        %v498 = vsub.s32 %v495, %v497
        %v499 = vrot.slane %v491, %v498
        %v501 = vunpack.c.l.s4 1983009808
        %v502 = vunpack.c.0.s8 %v501
        %v503 = vlaneseq
        %v504 = vshrl.u32 %v503, 7
        %v505 = vsub.s32 %v502, %v504
        %v506 = vrot.slane %v492, %v505
        %v507 = vcombine.low %v439, %v445
        %v508 = vcombine.high %v439, %v445
        %v510 = vunpack.c.l.s4 1983009808
        %v511 = vunpack.c.0.s8 %v510
        %v512 = vlaneseq
        %v513 = vshrl.u32 %v512, 7
        %v514 = vsub.s32 %v511, %v513
        %v515 = vrot.slane %v507, %v514
        %v517 = vunpack.c.l.s4 1983009808
        %v518 = vunpack.c.0.s8 %v517
        %v519 = vlaneseq
        %v520 = vshrl.u32 %v519, 7
        %v521 = vsub.s32 %v518, %v520
        %v522 = vrot.slane %v508, %v521
        %v523 = vcombine.low %v467, %v483
        %v524 = vcombine.high %v467, %v483
        %v526 = vunpack.c.l.s4 1934713408
        %v527 = vunpack.c.0.s8 %v526
        %v528 = vlaneseq
        %v529 = vshrl.u32 %v528, 7
        %v530 = vsub.s32 %v527, %v529
        %v531 = vrot.slane %v523, %v530
        %v533 = vunpack.c.l.s4 1934713408
        %v534 = vunpack.c.0.s8 %v533
        %v535 = vlaneseq
        %v536 = vshrl.u32 %v535, 7
        %v537 = vsub.s32 %v534, %v536
        %v538 = vrot.slane %v524, %v537
        %v539 = vcombine.low %v474, %v490
        %v540 = vcombine.high %v474, %v490
        %v542 = vunpack.c.l.s4 1934713408
        %v543 = vunpack.c.0.s8 %v542
        %v544 = vlaneseq
        %v545 = vshrl.u32 %v544, 7
        %v546 = vsub.s32 %v543, %v545
        %v547 = vrot.slane %v539, %v546
        %v549 = vunpack.c.l.s4 1934713408
        %v550 = vunpack.c.0.s8 %v549
        %v551 = vlaneseq
        %v552 = vshrl.u32 %v551, 7
        %v553 = vsub.s32 %v550, %v552
        %v554 = vrot.slane %v540, %v553
        %v555 = vcombine.low %v499, %v515
        %v556 = vcombine.high %v499, %v515
        %v558 = vunpack.c.l.s4 1934713408
        %v559 = vunpack.c.0.s8 %v558
        %v560 = vlaneseq
        %v561 = vshrl.u32 %v560, 7
        %v562 = vsub.s32 %v559, %v561
        %v563 = vrot.slane %v555, %v562
        %v565 = vunpack.c.l.s4 1934713408
        %v566 = vunpack.c.0.s8 %v565
        %v567 = vlaneseq
        %v568 = vshrl.u32 %v567, 7
        %v569 = vsub.s32 %v566, %v568
        %v570 = vrot.slane %v556, %v569
        %v571 = vcombine.low %v506, %v522
        %v572 = vcombine.high %v506, %v522
        %v574 = vunpack.c.l.s4 1934713408
        %v575 = vunpack.c.0.s8 %v574
        %v576 = vlaneseq
        %v577 = vshrl.u32 %v576, 7
        %v578 = vsub.s32 %v575, %v577
        %v579 = vrot.slane %v571, %v578
        %v581 = vunpack.c.l.s4 1934713408
        %v582 = vunpack.c.0.s8 %v581
        %v583 = vlaneseq
        %v584 = vshrl.u32 %v583, 7
        %v585 = vsub.s32 %v582, %v584
        %v586 = vrot.slane %v572, %v585
        %v587 = vcombine.low %v531, %v563
        %v588 = vcombine.high %v531, %v563
        %v589 = vcombine.low %v538, %v570
        %v590 = vcombine.high %v538, %v570
        %v591 = vcombine.low %v547, %v579
        %v592 = vcombine.high %v547, %v579
        %v593 = vcombine.low %v554, %v586
        %v594 = vcombine.high %v554, %v586
        %v595 = vcombine.low %v448, %v454
        %v596 = vcombine.high %v448, %v454
        %v598 = vunpack.c.l.s4 1983009808
        %v599 = vunpack.c.0.s8 %v598
        %v600 = vlaneseq
        %v601 = vshrl.u32 %v600, 7
        %v602 = vsub.s32 %v599, %v601
        %v603 = vrot.slane %v595, %v602
        %v605 = vunpack.c.l.s4 1983009808
        %v606 = vunpack.c.0.s8 %v605
        %v607 = vlaneseq
        %v608 = vshrl.u32 %v607, 7
        %v609 = vsub.s32 %v606, %v608
        %v610 = vrot.slane %v596, %v609
        %v611 = vcombine.low %v451, %v457
        %v612 = vcombine.high %v451, %v457
        %v614 = vunpack.c.l.s4 1983009808
        %v615 = vunpack.c.0.s8 %v614
        %v616 = vlaneseq
        %v617 = vshrl.u32 %v616, 7
        %v618 = vsub.s32 %v615, %v617
        %v619 = vrot.slane %v611, %v618
        %v621 = vunpack.c.l.s4 1983009808
        %v622 = vunpack.c.0.s8 %v621
        %v623 = vlaneseq
        %v624 = vshrl.u32 %v623, 7
        %v625 = vsub.s32 %v622, %v624
        %v626 = vrot.slane %v612, %v625
        %v627 = vcombine.low %v603, %v619
        %v628 = vcombine.high %v603, %v619
        %v630 = vunpack.c.l.s4 1934713408
        %v631 = vunpack.c.0.s8 %v630
        %v632 = vlaneseq
        %v633 = vshrl.u32 %v632, 7
        %v634 = vsub.s32 %v631, %v633
        %v635 = vrot.slane %v627, %v634
        %v637 = vunpack.c.l.s4 1934713408
        %v638 = vunpack.c.0.s8 %v637
        %v639 = vlaneseq
        %v640 = vshrl.u32 %v639, 7
        %v641 = vsub.s32 %v638, %v640
        %v642 = vrot.slane %v628, %v641
        %v643 = vcombine.low %v610, %v626
        %v644 = vcombine.high %v610, %v626
        %v646 = vunpack.c.l.s4 1934713408
        %v647 = vunpack.c.0.s8 %v646
        %v648 = vlaneseq
        %v649 = vshrl.u32 %v648, 7
        %v650 = vsub.s32 %v647, %v649
        %v651 = vrot.slane %v643, %v650
        %v653 = vunpack.c.l.s4 1934713408
        %v654 = vunpack.c.0.s8 %v653
        %v655 = vlaneseq
        %v656 = vshrl.u32 %v655, 7
        %v657 = vsub.s32 %v654, %v656
        %v658 = vrot.slane %v644, %v657
        %v659 = vcombine.high %v635, 0.0
        %v660 = vcombine.high %v642, 0.0
        %v661 = vcombine.high %v651, 0.0
        %v662 = vcombine.high %v658, 0.0
        %v663 = vcombine.low %v587, %v589
        %v664 = vcombine.high %v587, %v589
        %v666 = vunpack.c.l.s4 1983009808
        %v667 = vunpack.c.0.s8 %v666
        %v668 = vlaneseq
        %v669 = vshrl.u32 %v668, 7
        %v670 = vsub.s32 %v667, %v669
        %v671 = vrot.slane %v663, %v670
        %v673 = vunpack.c.l.s4 1983009808
        %v674 = vunpack.c.0.s8 %v673
        %v675 = vlaneseq
        %v676 = vshrl.u32 %v675, 7
        %v677 = vsub.s32 %v674, %v676
        %v678 = vrot.slane %v664, %v677
        %v679 = vcombine.low %v588, %v590
        %v680 = vcombine.high %v588, %v590
        %v682 = vunpack.c.l.s4 1983009808
        %v683 = vunpack.c.0.s8 %v682
        %v684 = vlaneseq
        %v685 = vshrl.u32 %v684, 7
        %v686 = vsub.s32 %v683, %v685
        %v687 = vrot.slane %v679, %v686
        %v689 = vunpack.c.l.s4 1983009808
        %v690 = vunpack.c.0.s8 %v689
        %v691 = vlaneseq
        %v692 = vshrl.u32 %v691, 7
        %v693 = vsub.s32 %v690, %v692
        %v694 = vrot.slane %v680, %v693
        %v695 = vcombine.low %v591, %v593
        %v696 = vcombine.high %v591, %v593
        %v698 = vunpack.c.l.s4 1983009808
        %v699 = vunpack.c.0.s8 %v698
        %v700 = vlaneseq
        %v701 = vshrl.u32 %v700, 7
        %v702 = vsub.s32 %v699, %v701
        %v703 = vrot.slane %v695, %v702
        %v705 = vunpack.c.l.s4 1983009808
        %v706 = vunpack.c.0.s8 %v705
        %v707 = vlaneseq
        %v708 = vshrl.u32 %v707, 7
        %v709 = vsub.s32 %v706, %v708
        %v710 = vrot.slane %v696, %v709
        %v711 = vcombine.low %v592, %v594
        %v712 = vcombine.high %v592, %v594
        %v714 = vunpack.c.l.s4 1983009808
        %v715 = vunpack.c.0.s8 %v714
        %v716 = vlaneseq
        %v717 = vshrl.u32 %v716, 7
        %v718 = vsub.s32 %v715, %v717
        %v719 = vrot.slane %v711, %v718
        %v721 = vunpack.c.l.s4 1983009808
        %v722 = vunpack.c.0.s8 %v721
        %v723 = vlaneseq
        %v724 = vshrl.u32 %v723, 7
        %v725 = vsub.s32 %v722, %v724
        %v726 = vrot.slane %v712, %v725
        %v727 = vcombine.low %v671, %v687
        %v728 = vcombine.high %v671, %v687
        %v730 = vunpack.c.l.s4 1934713408
        %v731 = vunpack.c.0.s8 %v730
        %v732 = vlaneseq
        %v733 = vshrl.u32 %v732, 7
        %v734 = vsub.s32 %v731, %v733
        %v735 = vrot.slane %v727, %v734
        %v737 = vunpack.c.l.s4 1934713408
        %v738 = vunpack.c.0.s8 %v737
        %v739 = vlaneseq
        %v740 = vshrl.u32 %v739, 7
        %v741 = vsub.s32 %v738, %v740
        %v742 = vrot.slane %v728, %v741
        %v743 = vcombine.low %v678, %v694
        %v744 = vcombine.high %v678, %v694
        %v746 = vunpack.c.l.s4 1934713408
        %v747 = vunpack.c.0.s8 %v746
        %v748 = vlaneseq
        %v749 = vshrl.u32 %v748, 7
        %v750 = vsub.s32 %v747, %v749
        %v751 = vrot.slane %v743, %v750
        %v753 = vunpack.c.l.s4 1934713408
        %v754 = vunpack.c.0.s8 %v753
        %v755 = vlaneseq
        %v756 = vshrl.u32 %v755, 7
        %v757 = vsub.s32 %v754, %v756
        %v758 = vrot.slane %v744, %v757
        %v759 = vcombine.low %v703, %v719
        %v760 = vcombine.high %v703, %v719
        %v762 = vunpack.c.l.s4 1934713408
        %v763 = vunpack.c.0.s8 %v762
        %v764 = vlaneseq
        %v765 = vshrl.u32 %v764, 7
        %v766 = vsub.s32 %v763, %v765
        %v767 = vrot.slane %v759, %v766
        %v769 = vunpack.c.l.s4 1934713408
        %v770 = vunpack.c.0.s8 %v769
        %v771 = vlaneseq
        %v772 = vshrl.u32 %v771, 7
        %v773 = vsub.s32 %v770, %v772
        %v774 = vrot.slane %v760, %v773
        %v775 = vcombine.low %v710, %v726
        %v776 = vcombine.high %v710, %v726
        %v778 = vunpack.c.l.s4 1934713408
        %v779 = vunpack.c.0.s8 %v778
        %v780 = vlaneseq
        %v781 = vshrl.u32 %v780, 7
        %v782 = vsub.s32 %v779, %v781
        %v783 = vrot.slane %v775, %v782
        %v785 = vunpack.c.l.s4 1934713408
        %v786 = vunpack.c.0.s8 %v785
        %v787 = vlaneseq
        %v788 = vshrl.u32 %v787, 7
        %v789 = vsub.s32 %v786, %v788
        %v790 = vrot.slane %v776, %v789
        %v791 = vcombine.low %v735, %v767
        %v792 = vcombine.high %v735, %v767
        %v793 = vcombine.low %v742, %v774
        %v794 = vcombine.high %v742, %v774
        %v795 = vcombine.low %v751, %v783
        %v796 = vcombine.high %v751, %v783
        %v797 = vcombine.low %v758, %v790
        %v798 = vcombine.high %v758, %v790
        %v799 = vcombine.low %v635, %v642
        %v801 = vunpack.c.l.s4 1983009808
        %v802 = vunpack.c.0.s8 %v801
        %v803 = vlaneseq
        %v804 = vshrl.u32 %v803, 7
        %v805 = vsub.s32 %v802, %v804
        %v806 = vrot.slane %v799, %v805
        %v807 = vcombine.low %v659, %v660
        %v809 = vunpack.c.l.s4 1983009808
        %v810 = vunpack.c.0.s8 %v809
        %v811 = vlaneseq
        %v812 = vshrl.u32 %v811, 7
        %v813 = vsub.s32 %v810, %v812
        %v814 = vrot.slane %v807, %v813
        %v815 = vcombine.low %v651, %v658
        %v817 = vunpack.c.l.s4 1983009808
        %v818 = vunpack.c.0.s8 %v817
        %v819 = vlaneseq
        %v820 = vshrl.u32 %v819, 7
        %v821 = vsub.s32 %v818, %v820
        %v822 = vrot.slane %v815, %v821
        %v823 = vcombine.low %v661, %v662
        %v825 = vunpack.c.l.s4 1983009808
        %v826 = vunpack.c.0.s8 %v825
        %v827 = vlaneseq
        %v828 = vshrl.u32 %v827, 7
        %v829 = vsub.s32 %v826, %v828
        %v830 = vrot.slane %v823, %v829
        %v831 = vcombine.low %v806, %v814
        %v832 = vcombine.high %v806, %v814
        %v834 = vunpack.c.l.s4 1934713408
        %v835 = vunpack.c.0.s8 %v834
        %v836 = vlaneseq
        %v837 = vshrl.u32 %v836, 7
        %v838 = vsub.s32 %v835, %v837
        %v839 = vrot.slane %v831, %v838
        %v841 = vunpack.c.l.s4 1934713408
        %v842 = vunpack.c.0.s8 %v841
        %v843 = vlaneseq
        %v844 = vshrl.u32 %v843, 7
        %v845 = vsub.s32 %v842, %v844
        %v846 = vrot.slane %v832, %v845
        %v847 = vcombine.low %v822, %v830
        %v848 = vcombine.high %v822, %v830
        %v850 = vunpack.c.l.s4 1934713408
        %v851 = vunpack.c.0.s8 %v850
        %v852 = vlaneseq
        %v853 = vshrl.u32 %v852, 7
        %v854 = vsub.s32 %v851, %v853
        %v855 = vrot.slane %v847, %v854
        %v857 = vunpack.c.l.s4 1934713408
        %v858 = vunpack.c.0.s8 %v857
        %v859 = vlaneseq
        %v860 = vshrl.u32 %v859, 7
        %v861 = vsub.s32 %v858, %v860
        %v862 = vrot.slane %v848, %v861
        %v863 = vcombine.low %v839, %v855
        %v864 = vcombine.high %v839, %v855
        %v865 = vcombine.low %v846, %v862
        %v866 = vcombine.high %v846, %v862
        %vm867 = vcmask 64512
        %868 = vst.msk [vmem:[%s308] sm:$0xff] %vm867, %v791
        %869 = vst.msk [vmem:[%s308 + $0x8] sm:$0xff] %vm867, %v792
        %870 = vst.msk [vmem:[%s308 + $0x10] sm:$0xff] %vm867, %v793
        %871 = vst.msk [vmem:[%s308 + $0x18] sm:$0xff] %vm867, %v794
        %872 = vst.msk [vmem:[%s308 + $0x20] sm:$0xff] %vm867, %v795
        %873 = vst.msk [vmem:[%s308 + $0x28] sm:$0xff] %vm867, %v796
        %874 = vst.msk [vmem:[%s308 + $0x30] sm:$0xff] %vm867, %v797
        %875 = vst.msk [vmem:[%s308 + $0x38] sm:$0xff] %vm867, %v798
        %876 = vst.msk [vmem:[%s308 + $0x40] sm:$0xff] %vm867, %v863
        %877 = vst.msk [vmem:[%s308 + $0x48] sm:$0xff] %vm867, %v864
        %878 = vst.msk [vmem:[%s308 + $0x50] sm:$0xff] %vm867, %v865
        %879 = vst.msk [vmem:[%s308 + $0x58] sm:$0xff] %vm867, %v866
        %s880 = sand.u32 %s158, 1
        %s881 = scalar_lea.sflag [#allocation4], %s880
        %s882 = sand.u32 %s158, 1
        %s883 = smul.addr %s882, 96
        %s884 = scalar_lea.vmem [#allocation11], %s883
        // Predicated region
        $region61: #{tpu_custom_call.1} parent=39 // pred_check
          %p885 = pneg %p168
        $region62: #{tpu_custom_call.1} parent=39 // pred_check_branch
          %887 = sbr.rel (%p885) target = $region64
        $region63: #{tpu_custom_call.1} parent=39 // pred_region
          %s889 = ssub.s32 1536, 1536
          %890 = vsyncadd %s881, %s889
          %s891 = smul.addr %s28, 12
          %s892 = sadd.s32 %s29, %s891
          %s893 = smul.addr %s892, 128
          %s894 = scalar_lea.hbm %s5, %s893
          %s895 = sshll.u32 %s884, 4
          %s896 = int_to_ptr.vmem [resolvable:$true] %s895
          %901 = dma.vmem_to_hbm [thread:$0]  %s896, 1536, %s894, %s881, 128, 128, 8
        $region64: #{tpu_custom_call.1} parent=39 // pred_fallthru
          _
      $region40: #{tpu_custom_call.1} parent=5 // pred_fallthru
        _
      %p902 = scmp.le.s32.totalorder 2, %s19
      // Predicated region
      $region65: #{tpu_custom_call.1} parent=5 // pred_check
        %p903 = pneg %p902
      $region66: #{tpu_custom_call.1} parent=5 // pred_check_branch
        %905 = sbr.rel (%p903) target = $region68
      $region67: #{tpu_custom_call.1} parent=5 // pred_region
        %s906 = ssub.s32 %s19, 2
        // Predicated region
        $region69: #{tpu_custom_call.1} parent=67 // pred_check
          %p907 = pneg %p174
        $region70: #{tpu_custom_call.1} parent=67 // pred_check_branch
          %909 = sbr.rel (%p907) target = $region72
        $region71: #{tpu_custom_call.1} parent=67 // pred_region
          %s910 = sand.u32 %s159, 1
          %s911 = scalar_lea.sflag [#allocation4], %s910
          %s912 = sand.u32 %s159, 1
          %s913 = smul.addr %s912, 96
          %s914 = scalar_lea.vmem [#allocation11], %s913
          %915 = dma.done %s911, 1536
        $region72: #{tpu_custom_call.1} parent=67 // pred_fallthru
          _
      $region68: #{tpu_custom_call.1} parent=5 // pred_fallthru
        _
    $region6: #{tpu_custom_call.1} parent=1 // loop_footer
      %s23 = sadd.s32 1, %s19
    $region7: #{tpu_custom_call.1} parent=1 // loop_footer_branch
      %18 = sbr.rel target = $region3
    $region8: #{tpu_custom_call.1} parent=1 // loop_exit
      _
    %916 = vsyncpa [#allocation3], 1
    %s917 = scalar_lea.sflag [#allocation3], 1
    %918 = vsyncpa %s917, 1
    %919 = vsyncpa [#allocation6], 1
    %920 = vsyncpa [#allocation9], 1
    %921 = vsyncpa [#allocation4], 1
    %s922 = scalar_lea.sflag [#allocation4], 1
    %923 = vsyncpa %s922, 1

</llo_original>
